<compile_context>
chip_gen: v7x
topology: tpu7x:2x2x1
jax: 0.10.0
libtpu: 0.0.40
codegen_flags: <defaults>
</compile_context>

<pallas_src>
import functools
import math

import jax
import jax.numpy as jnp
from jax.experimental import pallas as pl
from jax.experimental.pallas import tpu as pltpu

F32 = jnp.float32
BF16 = jnp.bfloat16


def _f2s_kernel(mu_ref, rstd_ref,           # scalar prefetch (SMEM): [B] f32 each
                xp_ref,                      # [1, T, Cp]    bf16  channel-last patch tile
                wq_ref, bq_ref,              # [Cp, Cp] bf16 (LN affine + scale folded), [1, Cp] f32
                kbd_ref,                     # [1, Cp, nC]   bf16  block-diagonal key (per batch)
                vp_ref,                      # [1, nC, Cp]   bf16  row-stacked projected V (per batch)
                bo_ref,                      # [1, Cp]       f32   proj bias
                hs_ref,                      # [n_heads, nC] f32   head selector rows (== S^T)
                s_ref,                       # [nC, n_heads] bf16  head indicator (== S)
                out_ref,                     # [1, T, Cp]    f32
                *, n_heads):
    b = pl.program_id(0)
    mu = mu_ref[b]
    rstd = rstd_ref[b]

    xpf = xp_ref[0].astype(F32)                                    # [T, Cp]

    # ---- norm_x (per-batch stats precomputed; affine folded into wq/bq) ----
    xn_b = ((xpf - mu) * rstd).astype(BF16)

    # ---- proj_q (1x1 conv) with attention scale folded in ------------------
    q_b = (jnp.dot(xn_b, wq_ref[...], preferred_element_type=F32)
           + bq_ref[...]).astype(BF16)                             # [T, Cp]

    # TODO(synk): Grapher (vision-GNN graph conv on the pre-softmax attention
    # map) is not defined in the provided source; treated as identity here.

    # ---- attention scores, all heads in one lane-dense MXU call ------------
    scores = jnp.dot(q_b, kbd_ref[0], preferred_element_type=F32)  # [T, nC]

    # ---- exact per-head max (no reshape / no lane slicing of scores) -------
    NEG = -1e30
    m = jnp.zeros_like(scores)
    for h in range(n_heads):                                       # tiny static unroll
        sel = hs_ref[pl.ds(h, 1), :] > 0.5                         # [1, nC]
        mh = jnp.max(jnp.where(sel, scores, NEG), axis=-1, keepdims=True)
        m = jnp.where(sel, mh, m)

    # ---- lane-dense per-head softmax ----------------------------------------
    e = jnp.exp(scores - m)                                        # one dense EUP pass
    den_h = jnp.dot(e.astype(BF16), s_ref[...],
                    preferred_element_type=F32)                    # [T, n_heads] per-head sums
    denom = jnp.dot(den_h.astype(BF16), hs_ref[...].astype(BF16),
                    preferred_element_type=F32)                    # [T, nC] broadcast back
    probs = (e * pl.reciprocal(denom, approx=True)).astype(BF16)

    # ---- attn @ V with the output projection pre-folded into V -------------
    o = jnp.dot(probs, vp_ref[0], preferred_element_type=F32)      # [T, Cp]

    # ---- residual (Dropout2d(p=0) == identity); lane-dense f32 store -------
    out_ref[0] = xpf + o + bo_ref[...]


def feature2semantic_block(x_cls, x_patch, params, n_heads):
    """x_cls: [B, Cls, C], x_patch: [B, C, Hp, Wp] (NCHW) -> [B, C, Hp, Wp]."""
    B, C, Hp, Wp = x_patch.shape
    Cls = x_cls.shape[1]
    HW = Hp * Wp
    dh = C // n_heads
    nC = n_heads * Cls
    scale = dh ** (-0.5)
    eps = 1e-5
    LANE = 128
    Cp = ((C + LANE - 1) // LANE) * LANE          # lane-dense channel padding
    pad_c = Cp - C

    # HW tiling: modest per-step activation block so production HW/C stay well
    # inside the scoped VMEM defaults (v5e 16 MiB / v6e,v7x 32 MiB):
    # at Cp=1024, T=256 -> xp tile 0.5 MiB bf16 + out 1 MiB f32 + wq 2 MiB bf16.
    T = min(256, HW)
    T = ((T + 7) // 8) * 8
    HWp = ((HW + T - 1) // T) * T
    nT = HWp // T

    x_patch = x_patch.astype(F32)
    x_cls = x_cls.astype(F32)

    # ---- per-batch norm_x statistics (exact two-pass, once per batch) -------
    mu = jnp.mean(x_patch, axis=(1, 2, 3))                           # [B]
    cen = x_patch - mu[:, None, None, None]
    var = jnp.mean(cen * cen, axis=(1, 2, 3))                        # [B] (biased, like the module)
    rstd = jax.lax.rsqrt(var + eps)                                  # [B]

    # ---- channel-last, lane-padded activations; bf16 to halve HBM traffic ---
    xp = jnp.transpose(x_patch, (0, 2, 3, 1)).reshape(B, HW, C)
    xp = jnp.pad(xp, ((0, 0), (0, HWp - HW), (0, pad_c))).astype(BF16)

    # ---- fold LayerNormGeneral affine + attention scale into proj_q ---------
    wq = (params["nx_w"][:, None] * params["wq"]) * scale            # [C, C]
    bq = (params["nx_b"] @ params["wq"] + params["bq"]) * scale      # [C]
    wq = jnp.pad(wq, ((0, pad_c), (0, pad_c))).astype(BF16)          # [Cp, Cp]
    bq = jnp.pad(bq, (0, pad_c)).astype(F32).reshape(1, Cp)

    # ---- cls branch (norm_cls + proj_kv + fold proj into V), once per batch -
    # O(B*Cls*C^2): negligible vs. the O(B*HW*C^2) patch-side work in the kernel.
    mu_c = jnp.mean(x_cls, axis=-1, keepdims=True)
    cc = x_cls - mu_c
    var_c = jnp.mean(cc * cc, axis=-1, keepdims=True)
    xcn = cc * jax.lax.rsqrt(var_c + eps) * params["nc_w"] + params["nc_b"]
    kv = xcn @ params["wkv"] + params["bkv"]                          # [B, Cls, 2C]
    k, v = kv[..., :C], kv[..., C:]

    # Block-diagonal key: kbd[b, h*dh+d, g*Cls+c] = k[b, c, h*dh+d] * (h == g)
    k4 = k.reshape(B, Cls, n_heads, dh)
    kbd = jnp.einsum("bchd,hg->bhdgc", k4, jnp.eye(n_heads, dtype=F32))
    kbd = kbd.reshape(B, C, nC)
    kbd = jnp.pad(kbd, ((0, 0), (0, pad_c), (0, 0))).astype(BF16)     # [B, Cp, nC]

    # Row-stacked projected values: vp[b, h*Cls+c, :] = v_h[b, c, :] @ proj_h
    v4 = v.reshape(B, Cls, n_heads, dh)
    wpr_h = params["wpr"].reshape(n_heads, dh, C)
    vp = jnp.einsum("bchd,hdo->bhco", v4, wpr_h).reshape(B, nC, C)
    vp = jnp.pad(vp, ((0, 0), (0, 0), (0, pad_c))).astype(BF16)       # [B, nC, Cp]

    bo = jnp.pad(params["bpr"], (0, pad_c)).astype(F32).reshape(1, Cp)

    # Head-indicator matrices for the packed, lane-dense per-head softmax.
    head_of = jnp.arange(nC) // Cls
    hs = (head_of[None, :] == jnp.arange(n_heads)[:, None]).astype(F32)  # [n_heads, nC]
    s = hs.T.astype(BF16)                                                # [nC, n_heads]

    kernel = functools.partial(_f2s_kernel, n_heads=n_heads)

    w2d = lambda b, t, *_: (0, 0)            # grid-invariant weights / constants
    per_b = lambda b, t, *_: (b, 0, 0)       # per-batch constants (resident across t)
    tile = lambda b, t, *_: (b, t, 0)        # HW-tiled activations

    out = pl.pallas_call(
        kernel,
        out_shape=jax.ShapeDtypeStruct((B, HWp, Cp), F32),
        grid_spec=pltpu.PrefetchScalarGridSpec(
            num_scalar_prefetch=2,           # mu, rstd -> SMEM
            grid=(B, nT),
            in_specs=[
                pl.BlockSpec((1, T, Cp), tile),        # x_patch tile (bf16)
                pl.BlockSpec((Cp, Cp), w2d),           # proj_q weight (folded)
                pl.BlockSpec((1, Cp), w2d),            # proj_q bias   (folded)
                pl.BlockSpec((1, Cp, nC), per_b),      # block-diag key
                pl.BlockSpec((1, nC, Cp), per_b),      # projected V stack
                pl.BlockSpec((1, Cp), w2d),            # proj bias
                pl.BlockSpec((n_heads, nC), w2d),      # head selector (S^T)
                pl.BlockSpec((nC, n_heads), w2d),      # head indicator (S)
            ],
            out_specs=pl.BlockSpec((1, T, Cp), tile),
        ),
        compiler_params=pltpu.CompilerParams(
            dimension_semantics=("parallel", "parallel")),
        # NOTE: at very large C the only remaining big resident block is wq
        # ([Cp,Cp] bf16, constant index_map); if it ever pressures VMEM,
        # single-buffer it with pipeline_mode=pl.Buffered(1) and raise
        # vmem_limit_bytes.  Unnecessary at these shapes.
    )(mu, rstd, xp, wq, bq, kbd, vp, bo, hs, s)

    out = out[:, :HW, :C].reshape(B, Hp, Wp, C)
    return jnp.transpose(out, (0, 3, 1, 2))


def reference(x_cls, x_patch, p, n_heads):
    """Pure-JAX f32 reference mirroring the PyTorch forward (grapher = identity)."""
    B, C, Hp, Wp = x_patch.shape
    Cls = x_cls.shape[1]
    HW = Hp * Wp
    dh = C // n_heads
    scale = dh ** (-0.5)
    eps = 1e-5

    xp = jnp.transpose(x_patch, (0, 2, 3, 1)).reshape(B, HW, C)

    mu = jnp.mean(xp, axis=(1, 2), keepdims=True)
    c = xp - mu
    s = jnp.mean(c * c, axis=(1, 2), keepdims=True)
    xn = c / jnp.sqrt(s + eps) * p["nx_w"] + p["nx_b"]
    q = xn @ p["wq"] + p["bq"]

    mu_c = jnp.mean(x_cls, axis=-1, keepdims=True)
    cc = x_cls - mu_c
    var_c = jnp.mean(cc * cc, axis=-1, keepdims=True)
    xcn = cc / jnp.sqrt(var_c + eps) * p["nc_w"] + p["nc_b"]
    kv = xcn @ p["wkv"] + p["bkv"]
    k, v = kv[..., :C], kv[..., C:]

    qh = q.reshape(B, HW, n_heads, dh).transpose(0, 2, 1, 3)     # [B,nh,HW,dh]
    kh = k.reshape(B, Cls, n_heads, dh).transpose(0, 2, 3, 1)    # [B,nh,dh,Cls]
    vh = v.reshape(B, Cls, n_heads, dh).transpose(0, 2, 1, 3)    # [B,nh,Cls,dh]
    attn = jnp.einsum("bhqd,bhdk->bhqk", qh, kh) * scale
    attn = jax.nn.softmax(attn, axis=-1)
    oh = jnp.einsum("bhqk,bhkd->bhqd", attn, vh)
    o = oh.transpose(0, 2, 1, 3).reshape(B, HW, C)
    o = o @ p["wpr"] + p["bpr"]
    out = xp + o
    return jnp.transpose(out.reshape(B, Hp, Wp, C), (0, 3, 1, 2))


if __name__ == "__main__":
    # Small, module-consistent shapes.
    B, C, Hp, Wp = 2, 32, 8, 8
    n_heads = 4
    Cls = 8                      # num_classes

    key = jax.random.PRNGKey(0)
    ks = jax.random.split(key, 10)

    x_cls = jax.random.normal(ks[0], (B, Cls, C), jnp.float32)
    x_patch = jax.random.normal(ks[1], (B, C, Hp, Wp), jnp.float32)

    def init_linear(k, fan_in, shape):
        bound = 1.0 / math.sqrt(fan_in)
        return jax.random.uniform(k, shape, jnp.float32, -bound, bound)

    params = {
        # LayerNormGeneral affine (C,1,1) -> stored flat [C]
        "nx_w": jnp.ones((C,), jnp.float32),
        "nx_b": jnp.zeros((C,), jnp.float32),
        # proj_q: Conv2d(C, C, 1)  -> weight stored as (Cin, Cout)
        "wq": init_linear(ks[2], C, (C, C)),
        "bq": init_linear(ks[3], C, (C,)),
        # norm_cls: nn.LayerNorm(C)
        "nc_w": jnp.ones((C,), jnp.float32),
        "nc_b": jnp.zeros((C,), jnp.float32),
        # proj_kv: Linear(C, 2C) -> weight stored as (Cin, 2C)
        "wkv": init_linear(ks[4], C, (C, 2 * C)),
        "bkv": init_linear(ks[5], C, (2 * C,)),
        # proj: Conv2d(C, C, 1) -> (Cin, Cout)
        "wpr": init_linear(ks[6], C, (C, C)),
        "bpr": init_linear(ks[7], C, (C,)),
    }

    out = feature2semantic_block(x_cls, x_patch, params, n_heads)
    out = jax.block_until_ready(out)

    ref = reference(x_cls, x_patch, params, n_heads)
    assert out.shape == (B, C, Hp, Wp)
    # bf16 MXU operands / bf16 activations + approximate reciprocal -> relaxed
    # tolerance vs. the f32 reference.
    assert jnp.allclose(out, ref, atol=5e-2, rtol=5e-2), \
        f"max abs diff {jnp.max(jnp.abs(out - ref))}"

    print("KERNEL_OK")
</pallas_src>

<mosaic_0001>
module attributes {stable_mosaic.version = 11 : i64} {
  func.func @_f2s_kernel(%arg0: i32, %arg1: i32, %arg2: memref<2xf32, #tpu.memory_space<smem>>, %arg3: memref<2xf32, #tpu.memory_space<smem>>, %arg4: memref<1x64x128xbf16, #tpu.memory_space<vmem>>, %arg5: memref<128x128xbf16, #tpu.memory_space<vmem>>, %arg6: memref<1x128xf32, #tpu.memory_space<vmem>>, %arg7: memref<1x128x32xbf16, #tpu.memory_space<vmem>>, %arg8: memref<1x32x128xbf16, #tpu.memory_space<vmem>>, %arg9: memref<1x128xf32, #tpu.memory_space<vmem>>, %arg10: memref<4x32xf32, #tpu.memory_space<vmem>>, %arg11: memref<32x4xbf16, #tpu.memory_space<vmem>>, %arg12: memref<1x64x128xf32, #tpu.memory_space<vmem>>) attributes {dimension_semantics = [#tpu.dimension_semantics<parallel>, #tpu.dimension_semantics<parallel>], iteration_bounds = array<i64: 2, 1>, scalar_prefetch = 2 : i64, scratch_operands = 0 : i64, tpu.core_type = #tpu.core_type<tc>, window_params = [{transform_indices = @transform_0, window_bounds = array<i64: 1, 64, 128>}, {pipeline_mode = #tpu.pipeline_mode<synchronous>, transform_indices = @transform_1, window_bounds = array<i64: 128, 128>}, {pipeline_mode = #tpu.pipeline_mode<synchronous>, transform_indices = @transform_2, window_bounds = array<i64: 1, 128>}, {transform_indices = @transform_3, window_bounds = array<i64: 1, 128, 32>}, {transform_indices = @transform_4, window_bounds = array<i64: 1, 32, 128>}, {pipeline_mode = #tpu.pipeline_mode<synchronous>, transform_indices = @transform_5, window_bounds = array<i64: 1, 128>}, {pipeline_mode = #tpu.pipeline_mode<synchronous>, transform_indices = @transform_6, window_bounds = array<i64: 4, 32>}, {pipeline_mode = #tpu.pipeline_mode<synchronous>, transform_indices = @transform_7, window_bounds = array<i64: 32, 4>}, {transform_indices = @transform_8, window_bounds = array<i64: 1, 64, 128>}]} {
    %0 = arith.index_cast %arg0 : i32 to index
    %1 = memref.load %arg2[%0] : memref<2xf32, #tpu.memory_space<smem>>
    %2 = arith.index_cast %arg0 : i32 to index
    %3 = memref.load %arg3[%2] : memref<2xf32, #tpu.memory_space<smem>>
    %c0 = arith.constant 0 : index
    %c0_0 = arith.constant 0 : index
    %c0_1 = arith.constant 0 : index
    %4 = vector.load %arg4[%c0, %c0_0, %c0_1] : memref<1x64x128xbf16, #tpu.memory_space<vmem>>, vector<1x64x128xbf16>
    %5 = vector.shape_cast %4 : vector<1x64x128xbf16> to vector<64x128xbf16>
    %6 = arith.extf %5 : vector<64x128xbf16> to vector<64x128xf32>
    %7 = vector.broadcast %1 : f32 to vector<64x128xf32>
    %8 = arith.subf %6, %7 : vector<64x128xf32>
    %9 = vector.broadcast %3 : f32 to vector<64x128xf32>
    %10 = arith.mulf %8, %9 : vector<64x128xf32>
    %11 = arith.truncf %10 : vector<64x128xf32> to vector<64x128xbf16>
    %c0_2 = arith.constant 0 : index
    %c0_3 = arith.constant 0 : index
    %12 = vector.load %arg5[%c0_2, %c0_3] : memref<128x128xbf16, #tpu.memory_space<vmem>>, vector<128x128xbf16>
    %cst = arith.constant dense<0.000000e+00> : vector<64x128xf32>
    %13 = tpu.matmul %11, %12, %cst {dimension_numbers = #tpu.dot_dimension_numbers<[1], [0], [0], [1], [0, 0, 1, 1], [], []>} : vector<64x128xbf16>, vector<128x128xbf16>, vector<64x128xf32> -> vector<64x128xf32>
    %c0_4 = arith.constant 0 : index
    %c0_5 = arith.constant 0 : index
    %14 = vector.load %arg6[%c0_4, %c0_5] : memref<1x128xf32, #tpu.memory_space<vmem>>, vector<1x128xf32>
    %15 = vector.broadcast %14 : vector<1x128xf32> to vector<64x128xf32>
    %16 = arith.addf %13, %15 : vector<64x128xf32>
    %17 = arith.truncf %16 : vector<64x128xf32> to vector<64x128xbf16>
    %c0_6 = arith.constant 0 : index
    %c0_7 = arith.constant 0 : index
    %c0_8 = arith.constant 0 : index
    %18 = vector.load %arg7[%c0_6, %c0_7, %c0_8] : memref<1x128x32xbf16, #tpu.memory_space<vmem>>, vector<1x128x32xbf16>
    %19 = vector.shape_cast %18 : vector<1x128x32xbf16> to vector<128x32xbf16>
    %cst_9 = arith.constant dense<0.000000e+00> : vector<64x32xf32>
    %20 = tpu.matmul %17, %19, %cst_9 {dimension_numbers = #tpu.dot_dimension_numbers<[1], [0], [0], [1], [0, 0, 1, 1], [], []>} : vector<64x128xbf16>, vector<128x32xbf16>, vector<64x32xf32> -> vector<64x32xf32>
    %cst_10 = arith.constant 0.000000e+00 : f32
    %21 = vector.broadcast %cst_10 : f32 to vector<64x32xf32>
    %c0_11 = arith.constant 0 : index
    %c0_12 = arith.constant 0 : index
    %22 = vector.load %arg10[%c0_11, %c0_12] : memref<4x32xf32, #tpu.memory_space<vmem>>, vector<1x32xf32>
    %cst_13 = arith.constant 5.000000e-01 : f32
    %23 = vector.broadcast %cst_13 : f32 to vector<1x32xf32>
    %24 = arith.cmpf ogt, %22, %23 : vector<1x32xf32>
    %cst_14 = arith.constant -1.000000e+30 : f32
    %25 = vector.shape_cast %24 : vector<1x32xi1> to vector<1x32xi1>
    %26 = vector.broadcast %25 : vector<1x32xi1> to vector<64x32xi1>
    %27 = vector.broadcast %cst_14 : f32 to vector<64x32xf32>
    %28 = arith.select %26, %20, %27 : vector<64x32xi1>, vector<64x32xf32>
    %cst_15 = arith.constant dense<0xFF800000> : vector<64xf32>
    %29 = vector.multi_reduction <maximumf>, %28, %cst_15 [1] : vector<64x32xf32> to vector<64xf32>
    %30 = vector.shape_cast %29 : vector<64xf32> to vector<64x1xf32>
    %31 = vector.shape_cast %24 : vector<1x32xi1> to vector<1x32xi1>
    %32 = vector.broadcast %31 : vector<1x32xi1> to vector<64x32xi1>
    %33 = vector.shape_cast %30 : vector<64x1xf32> to vector<64x1xf32>
    %34 = vector.broadcast %33 : vector<64x1xf32> to vector<64x32xf32>
    %35 = arith.select %32, %34, %21 : vector<64x32xi1>, vector<64x32xf32>
    %c1 = arith.constant 1 : index
    %c0_16 = arith.constant 0 : index
    %36 = vector.load %arg10[%c1, %c0_16] : memref<4x32xf32, #tpu.memory_space<vmem>>, vector<1x32xf32>
    %cst_17 = arith.constant 5.000000e-01 : f32
    %37 = vector.broadcast %cst_17 : f32 to vector<1x32xf32>
    %38 = arith.cmpf ogt, %36, %37 : vector<1x32xf32>
    %cst_18 = arith.constant -1.000000e+30 : f32
    %39 = vector.shape_cast %38 : vector<1x32xi1> to vector<1x32xi1>
    %40 = vector.broadcast %39 : vector<1x32xi1> to vector<64x32xi1>
    %41 = vector.broadcast %cst_18 : f32 to vector<64x32xf32>
    %42 = arith.select %40, %20, %41 : vector<64x32xi1>, vector<64x32xf32>
    %cst_19 = arith.constant dense<0xFF800000> : vector<64xf32>
    %43 = vector.multi_reduction <maximumf>, %42, %cst_19 [1] : vector<64x32xf32> to vector<64xf32>
    %44 = vector.shape_cast %43 : vector<64xf32> to vector<64x1xf32>
    %45 = vector.shape_cast %38 : vector<1x32xi1> to vector<1x32xi1>
    %46 = vector.broadcast %45 : vector<1x32xi1> to vector<64x32xi1>
    %47 = vector.shape_cast %44 : vector<64x1xf32> to vector<64x1xf32>
    %48 = vector.broadcast %47 : vector<64x1xf32> to vector<64x32xf32>
    %49 = arith.select %46, %48, %35 : vector<64x32xi1>, vector<64x32xf32>
    %c2 = arith.constant 2 : index
    %c0_20 = arith.constant 0 : index
    %50 = vector.load %arg10[%c2, %c0_20] : memref<4x32xf32, #tpu.memory_space<vmem>>, vector<1x32xf32>
    %cst_21 = arith.constant 5.000000e-01 : f32
    %51 = vector.broadcast %cst_21 : f32 to vector<1x32xf32>
    %52 = arith.cmpf ogt, %50, %51 : vector<1x32xf32>
    %cst_22 = arith.constant -1.000000e+30 : f32
    %53 = vector.shape_cast %52 : vector<1x32xi1> to vector<1x32xi1>
    %54 = vector.broadcast %53 : vector<1x32xi1> to vector<64x32xi1>
    %55 = vector.broadcast %cst_22 : f32 to vector<64x32xf32>
    %56 = arith.select %54, %20, %55 : vector<64x32xi1>, vector<64x32xf32>
    %cst_23 = arith.constant dense<0xFF800000> : vector<64xf32>
    %57 = vector.multi_reduction <maximumf>, %56, %cst_23 [1] : vector<64x32xf32> to vector<64xf32>
    %58 = vector.shape_cast %57 : vector<64xf32> to vector<64x1xf32>
    %59 = vector.shape_cast %52 : vector<1x32xi1> to vector<1x32xi1>
    %60 = vector.broadcast %59 : vector<1x32xi1> to vector<64x32xi1>
    %61 = vector.shape_cast %58 : vector<64x1xf32> to vector<64x1xf32>
    %62 = vector.broadcast %61 : vector<64x1xf32> to vector<64x32xf32>
    %63 = arith.select %60, %62, %49 : vector<64x32xi1>, vector<64x32xf32>
    %c3 = arith.constant 3 : index
    %c0_24 = arith.constant 0 : index
    %64 = vector.load %arg10[%c3, %c0_24] : memref<4x32xf32, #tpu.memory_space<vmem>>, vector<1x32xf32>
    %cst_25 = arith.constant 5.000000e-01 : f32
    %65 = vector.broadcast %cst_25 : f32 to vector<1x32xf32>
    %66 = arith.cmpf ogt, %64, %65 : vector<1x32xf32>
    %cst_26 = arith.constant -1.000000e+30 : f32
    %67 = vector.shape_cast %66 : vector<1x32xi1> to vector<1x32xi1>
    %68 = vector.broadcast %67 : vector<1x32xi1> to vector<64x32xi1>
    %69 = vector.broadcast %cst_26 : f32 to vector<64x32xf32>
    %70 = arith.select %68, %20, %69 : vector<64x32xi1>, vector<64x32xf32>
    %cst_27 = arith.constant dense<0xFF800000> : vector<64xf32>
    %71 = vector.multi_reduction <maximumf>, %70, %cst_27 [1] : vector<64x32xf32> to vector<64xf32>
    %72 = vector.shape_cast %71 : vector<64xf32> to vector<64x1xf32>
    %73 = vector.shape_cast %66 : vector<1x32xi1> to vector<1x32xi1>
    %74 = vector.broadcast %73 : vector<1x32xi1> to vector<64x32xi1>
    %75 = vector.shape_cast %72 : vector<64x1xf32> to vector<64x1xf32>
    %76 = vector.broadcast %75 : vector<64x1xf32> to vector<64x32xf32>
    %77 = arith.select %74, %76, %63 : vector<64x32xi1>, vector<64x32xf32>
    %78 = arith.subf %20, %77 : vector<64x32xf32>
    %79 = math.exp %78 : vector<64x32xf32>
    %80 = arith.truncf %79 : vector<64x32xf32> to vector<64x32xbf16>
    %c0_28 = arith.constant 0 : index
    %c0_29 = arith.constant 0 : index
    %81 = vector.load %arg11[%c0_28, %c0_29] : memref<32x4xbf16, #tpu.memory_space<vmem>>, vector<32x4xbf16>
    %cst_30 = arith.constant dense<0.000000e+00> : vector<64x4xf32>
    %82 = tpu.matmul %80, %81, %cst_30 {dimension_numbers = #tpu.dot_dimension_numbers<[1], [0], [0], [1], [0, 0, 1, 1], [], []>} : vector<64x32xbf16>, vector<32x4xbf16>, vector<64x4xf32> -> vector<64x4xf32>
    %83 = arith.truncf %82 : vector<64x4xf32> to vector<64x4xbf16>
    %c0_31 = arith.constant 0 : index
    %c0_32 = arith.constant 0 : index
    %84 = vector.load %arg10[%c0_31, %c0_32] : memref<4x32xf32, #tpu.memory_space<vmem>>, vector<4x32xf32>
    %85 = arith.truncf %84 : vector<4x32xf32> to vector<4x32xbf16>
    %cst_33 = arith.constant dense<0.000000e+00> : vector<64x32xf32>
    %86 = tpu.matmul %83, %85, %cst_33 {dimension_numbers = #tpu.dot_dimension_numbers<[1], [0], [0], [1], [0, 0, 1, 1], [], []>} : vector<64x4xbf16>, vector<4x32xbf16>, vector<64x32xf32> -> vector<64x32xf32>
    %87 = tpu.reciprocal %86 {approx = true} : vector<64x32xf32> -> vector<64x32xf32>
    %88 = arith.mulf %79, %87 : vector<64x32xf32>
    %89 = arith.truncf %88 : vector<64x32xf32> to vector<64x32xbf16>
    %c0_34 = arith.constant 0 : index
    %c0_35 = arith.constant 0 : index
    %c0_36 = arith.constant 0 : index
    %90 = vector.load %arg8[%c0_34, %c0_35, %c0_36] : memref<1x32x128xbf16, #tpu.memory_space<vmem>>, vector<1x32x128xbf16>
    %91 = vector.shape_cast %90 : vector<1x32x128xbf16> to vector<32x128xbf16>
    %cst_37 = arith.constant dense<0.000000e+00> : vector<64x128xf32>
    %92 = tpu.matmul %89, %91, %cst_37 {dimension_numbers = #tpu.dot_dimension_numbers<[1], [0], [0], [1], [0, 0, 1, 1], [], []>} : vector<64x32xbf16>, vector<32x128xbf16>, vector<64x128xf32> -> vector<64x128xf32>
    %93 = arith.addf %6, %92 : vector<64x128xf32>
    %c0_38 = arith.constant 0 : index
    %c0_39 = arith.constant 0 : index
    %94 = vector.load %arg9[%c0_38, %c0_39] : memref<1x128xf32, #tpu.memory_space<vmem>>, vector<1x128xf32>
    %95 = vector.broadcast %94 : vector<1x128xf32> to vector<64x128xf32>
    %96 = arith.addf %93, %95 : vector<64x128xf32>
    %c0_40 = arith.constant 0 : index
    %c0_41 = arith.constant 0 : index
    %c0_42 = arith.constant 0 : index
    %97 = vector.load %arg12[%c0_40, %c0_41, %c0_42] : memref<1x64x128xf32, #tpu.memory_space<vmem>>, vector<1x64x128xf32>
    %98 = vector.shape_cast %97 : vector<1x64x128xf32> to vector<64x128xf32>
    %99 = vector.shape_cast %96 : vector<64x128xf32> to vector<1x64x128xf32>
    tpu.vector_store %arg12[%c0_40, %c0_41, %c0_42], %99 {strides = array<i32>} : memref<1x64x128xf32, #tpu.memory_space<vmem>>, vector<1x64x128xf32>,
    return
  }
  func.func @transform_0(%arg0: i32, %arg1: i32, %arg2: memref<2xf32, #tpu.memory_space<smem>>, %arg3: memref<2xf32, #tpu.memory_space<smem>>) -> (i32, i32, i32) {
    %c0_i32 = arith.constant 0 : i32
    %c0_i32_0 = arith.constant 0 : i32
    return %arg0, %arg1, %c0_i32 : i32, i32, i32
  }
  func.func @transform_1(%arg0: i32, %arg1: i32, %arg2: memref<2xf32, #tpu.memory_space<smem>>, %arg3: memref<2xf32, #tpu.memory_space<smem>>) -> (i32, i32) {
    %c0_i32 = arith.constant 0 : i32
    %c0_i32_0 = arith.constant 0 : i32
    %c0_i32_1 = arith.constant 0 : i32
    return %c0_i32, %c0_i32_0 : i32, i32
  }
  func.func @transform_2(%arg0: i32, %arg1: i32, %arg2: memref<2xf32, #tpu.memory_space<smem>>, %arg3: memref<2xf32, #tpu.memory_space<smem>>) -> (i32, i32) {
    %c0_i32 = arith.constant 0 : i32
    %c0_i32_0 = arith.constant 0 : i32
    %c0_i32_1 = arith.constant 0 : i32
    return %c0_i32, %c0_i32_0 : i32, i32
  }
  func.func @transform_3(%arg0: i32, %arg1: i32, %arg2: memref<2xf32, #tpu.memory_space<smem>>, %arg3: memref<2xf32, #tpu.memory_space<smem>>) -> (i32, i32, i32) {
    %c0_i32 = arith.constant 0 : i32
    %c0_i32_0 = arith.constant 0 : i32
    %c0_i32_1 = arith.constant 0 : i32
    return %arg0, %c0_i32, %c0_i32_0 : i32, i32, i32
  }
  func.func @transform_4(%arg0: i32, %arg1: i32, %arg2: memref<2xf32, #tpu.memory_space<smem>>, %arg3: memref<2xf32, #tpu.memory_space<smem>>) -> (i32, i32, i32) {
    %c0_i32 = arith.constant 0 : i32
    %c0_i32_0 = arith.constant 0 : i32
    %c0_i32_1 = arith.constant 0 : i32
    return %arg0, %c0_i32, %c0_i32_0 : i32, i32, i32
  }
  func.func @transform_5(%arg0: i32, %arg1: i32, %arg2: memref<2xf32, #tpu.memory_space<smem>>, %arg3: memref<2xf32, #tpu.memory_space<smem>>) -> (i32, i32) {
    %c0_i32 = arith.constant 0 : i32
    %c0_i32_0 = arith.constant 0 : i32
    %c0_i32_1 = arith.constant 0 : i32
    return %c0_i32, %c0_i32_0 : i32, i32
  }
  func.func @transform_6(%arg0: i32, %arg1: i32, %arg2: memref<2xf32, #tpu.memory_space<smem>>, %arg3: memref<2xf32, #tpu.memory_space<smem>>) -> (i32, i32) {
    %c0_i32 = arith.constant 0 : i32
    %c0_i32_0 = arith.constant 0 : i32
    %c0_i32_1 = arith.constant 0 : i32
    return %c0_i32, %c0_i32_0 : i32, i32
  }
  func.func @transform_7(%arg0: i32, %arg1: i32, %arg2: memref<2xf32, #tpu.memory_space<smem>>, %arg3: memref<2xf32, #tpu.memory_space<smem>>) -> (i32, i32) {
    %c0_i32 = arith.constant 0 : i32
    %c0_i32_0 = arith.constant 0 : i32
    %c0_i32_1 = arith.constant 0 : i32
    return %c0_i32, %c0_i32_0 : i32, i32
  }
  func.func @transform_8(%arg0: i32, %arg1: i32, %arg2: memref<2xf32, #tpu.memory_space<smem>>, %arg3: memref<2xf32, #tpu.memory_space<smem>>) -> (i32, i32, i32) {
    %c0_i32 = arith.constant 0 : i32
    %c0_i32_0 = arith.constant 0 : i32
    return %arg0, %arg1, %c0_i32 : i32, i32, i32
  }
}

</mosaic_0001>

<llo_original>
// kernel: tpu_custom_call.1
$region0: #{tpu_custom_call.1}
  #allocation0 [shape = 'u32[]', space=smem, size = 0x4, offset = 0x4, fixed_abs, tag = 'smem constant byte address 0x4 - core index']
  #allocation1 [shape = 'u32[144,128]{1,0:T(1,128)}', space=vmem, size = 0x12000, scoped, tag = 'internal scratch']
  #allocation2 [shape = 's32[1]{0}', space=sflag, size = 0x4, scoped, tag = 'scoped memory for tpu_custom_call.1']
  #allocation3 [shape = 'u8[512]{0}', space=smem, size = 0x200, scoped, tag = 'prefetched SMEM operand 0']
  #allocation4 [shape = 'u8[512]{0}', space=smem, size = 0x200, scoped, tag = 'prefetched SMEM operand 1']
  %s0 = inlined_call_operand.hbm [shape: f32[2], index: 0, kind: input, shape index: {}]
  %s1 = inlined_call_operand.hbm [shape: f32[2], index: 1, kind: input, shape index: {}]
  %s2 = inlined_call_operand.vmem [shape: bf16[2,64,128], index: 2, kind: input, shape index: {}]
  %s3 = inlined_call_operand.vmem [shape: bf16[128,128], index: 3, kind: input, shape index: {}]
  %s4 = inlined_call_operand.hbm [shape: f32[1,128], index: 4, kind: input, shape index: {}]
  %s5 = inlined_call_operand.vmem [shape: bf16[2,128,32], index: 5, kind: input, shape index: {}]
  %s6 = inlined_call_operand.vmem [shape: bf16[2,32,128], index: 6, kind: input, shape index: {}]
  %s7 = inlined_call_operand.vmem [shape: f32[1,128], index: 7, kind: input, shape index: {}]
  %s8 = inlined_call_operand.vmem [shape: f32[4,32], index: 8, kind: input, shape index: {}]
  %s9 = inlined_call_operand.vmem [shape: bf16[32,4], index: 9, kind: input, shape index: {}]
  %s10 = inlined_call_operand.hbm [shape: f32[2,64,128], index: 10, kind: output, shape index: {}]
  %s11 = sld [smem:[#allocation0]]
  $region69: #{tpu_custom_call.1} parent=0
    _
  %s13 = ssub.s32 1, %s11
  %s14 = scalar_select 0, %s13, %s11
  %16 = dma.hbm_to_smem %s0, 16, [#allocation3], [#allocation2]
  %18 = dma.hbm_to_smem %s1, 16, [#allocation4], [#allocation2]
  %19 = dma.done [#allocation2], 32
  %20 = sfence
  $region1: #{tpu_custom_call.1} parent=0
    #allocation5 [shape = 'u8[512]{0}', space=vmem, size = 0x400, scoped, tag = 'input window, operand 4, single buffered']
    #allocation6 [shape = 's32[2]{0}', space=sflag, size = 0x8, scoped, tag = 'scoped memory for tpu_custom_call.1']
    #allocation7 [shape = 's32[2]{0}', space=sflag, size = 0x8, scoped, tag = 'scoped memory for tpu_custom_call.1']
    #allocation8 [shape = 'u8[65536]{0}', space=vmem, size = 0x10000, scoped, tag = 'output window, operand 0']
    %21 = vsyncpa [#allocation6], 0
    %22 = vsyncpa [#allocation7], 0
    %s23 = scalar_lea.sflag [#allocation7], 1
    %24 = vsyncpa %s23, 0
    loop: start=0, step=1, limit=4
    $region2: #{tpu_custom_call.1} parent=1 // loop_pre_header
      _
    $region3: #{tpu_custom_call.1} parent=1 // loop_header
      %s26 = sphi 0, %s30
      %p27 = scmp.ge.s32.totalorder %s26, 4
      %s33 = sphi 0, %s45
      %s34 = sphi 0, %s41
      %s35 = sphi 0, %s33
      %s36 = sphi 0, %s34
      %s37 = sphi 0, %s35
      %s38 = sphi 0, %s36
      %s50 = sphi 0, %s52
      %s53 = sphi 0, %s50
      %s54 = sphi 0, %s53
      %s70 = sphi 0, %s54
      %s74 = sphi 0, %s74
      %s76 = sphi 0, %s74
      %s77 = sphi 0, %s76
      %s91 = sphi 0, %s77
      %s95 = sphi 0, %s95
      %s97 = sphi 0, %s95
      %s98 = sphi 0, %s97
      %s112 = sphi 0, %s98
      %s118 = sphi 0, %s120
      %s121 = sphi 0, %s118
      %s122 = sphi 0, %s121
      %s138 = sphi 0, %s122
      %s144 = sphi 0, %s146
      %s147 = sphi 0, %s144
      %s148 = sphi 0, %s147
      %s164 = sphi 0, %s148
      %s168 = sphi 0, %s168
      %s170 = sphi 0, %s168
      %s171 = sphi 0, %s170
      %s185 = sphi 0, %s171
      %s189 = sphi 0, %s189
      %s191 = sphi 0, %s189
      %s192 = sphi 0, %s191
      %s206 = sphi 0, %s192
      %s210 = sphi 0, %s210
      %s212 = sphi 0, %s210
      %s213 = sphi 0, %s212
      %s227 = sphi 0, %s213
      %s235 = sphi 0, %s237
      %s238 = sphi 0, %s235
      %s239 = sphi 0, %s238
      %s255 = sphi 0, %s239
    $region4: #{tpu_custom_call.1} parent=1 // loop_header_branch
      %29 = sbr.rel (%p27) target = $region8
    $region5: #{tpu_custom_call.1} parent=1 // loop_body
      %s31 = ssub.s32 %s26, 1
      %s32 = ssub.s32 %s26, 2
      %s39 = sadd.s32 1, %s34
      %p40 = scmp.ge.s32.totalorder %s39, 1
      %s41 = scalar_select %p40, 0, %s39
      %s42 = sadd.s32 1, %s33
      %s43 = scalar_select %p40, %s42, %s33
      %p44 = scmp.ge.s32.totalorder %s43, 2
      %s45 = scalar_select %p44, 0, %s43
      %s46 = ssub.s32 %s33, %s45
      %s47 = ssub.s32 %s34, %s41
      %s48 = sor.u32 %s46, %s47
      %p49 = scmp.eq.s32.totalorder %s48, 0
      %s51 = sadd.s32 %s50, 1
      %s52 = scalar_select %p49, %s50, %s51
      %p55 = pneg %p49
      %p56 = scmp.eq.s32.totalorder %s26, 1
      %p57 = por %p55, %p56
      %p58 = scmp.ne.s32.totalorder %s50, %s53
      %p59 = scmp.eq.s32.totalorder %s26, 0
      %p60 = por %p58, %p59
      %p61 = scmp.ne.s32.totalorder %s50, %s53
      %p62 = scmp.eq.s32.totalorder %s31, 1
      %p63 = por %p61, %p62
      %p64 = scmp.ne.s32.totalorder %s53, %s54
      %p65 = scmp.eq.s32.totalorder %s31, 0
      %p66 = por %p64, %p65
      %p67 = scmp.ne.s32.totalorder %s53, %s54
      %p68 = scmp.eq.s32.totalorder %s32, 1
      %p69 = por %p67, %p68
      %p71 = scmp.ne.s32.totalorder %s54, %s70
      %p72 = scmp.eq.s32.totalorder %s32, 0
      %p73 = por %p71, %p72
      %s75 = sadd.s32 %s74, 1
      %p78 = scmp.eq.s32.totalorder %s26, 1
      %p79 = scmp.ne.s32.totalorder %s74, %s76
      %p80 = scmp.eq.s32.totalorder %s26, 0
      %p81 = por %p79, %p80
      %p82 = scmp.ne.s32.totalorder %s74, %s76
      %p83 = scmp.eq.s32.totalorder %s31, 1
      %p84 = por %p82, %p83
      %p85 = scmp.ne.s32.totalorder %s76, %s77
      %p86 = scmp.eq.s32.totalorder %s31, 0
      %p87 = por %p85, %p86
      %p88 = scmp.ne.s32.totalorder %s76, %s77
      %p89 = scmp.eq.s32.totalorder %s32, 1
      %p90 = por %p88, %p89
      %p92 = scmp.ne.s32.totalorder %s77, %s91
      %p93 = scmp.eq.s32.totalorder %s32, 0
      %p94 = por %p92, %p93
      %s96 = sadd.s32 %s95, 1
      %p99 = scmp.eq.s32.totalorder %s26, 1
      %p100 = scmp.ne.s32.totalorder %s95, %s97
      %p101 = scmp.eq.s32.totalorder %s26, 0
      %p102 = por %p100, %p101
      %p103 = scmp.ne.s32.totalorder %s95, %s97
      %p104 = scmp.eq.s32.totalorder %s31, 1
      %p105 = por %p103, %p104
      %p106 = scmp.ne.s32.totalorder %s97, %s98
      %p107 = scmp.eq.s32.totalorder %s31, 0
      %p108 = por %p106, %p107
      %p109 = scmp.ne.s32.totalorder %s97, %s98
      %p110 = scmp.eq.s32.totalorder %s32, 1
      %p111 = por %p109, %p110
      %p113 = scmp.ne.s32.totalorder %s98, %s112
      %p114 = scmp.eq.s32.totalorder %s32, 0
      %p115 = por %p113, %p114
      %s116 = ssub.s32 %s33, %s45
      %p117 = scmp.eq.s32.totalorder %s116, 0
      %s119 = sadd.s32 %s118, 1
      %s120 = scalar_select %p117, %s118, %s119
      %p123 = pneg %p117
      %p124 = scmp.eq.s32.totalorder %s26, 1
      %p125 = por %p123, %p124
      %p126 = scmp.ne.s32.totalorder %s118, %s121
      %p127 = scmp.eq.s32.totalorder %s26, 0
      %p128 = por %p126, %p127
      %p129 = scmp.ne.s32.totalorder %s118, %s121
      %p130 = scmp.eq.s32.totalorder %s31, 1
      %p131 = por %p129, %p130
      %p132 = scmp.ne.s32.totalorder %s121, %s122
      %p133 = scmp.eq.s32.totalorder %s31, 0
      %p134 = por %p132, %p133
      %p135 = scmp.ne.s32.totalorder %s121, %s122
      %p136 = scmp.eq.s32.totalorder %s32, 1
      %p137 = por %p135, %p136
      %p139 = scmp.ne.s32.totalorder %s122, %s138
      %p140 = scmp.eq.s32.totalorder %s32, 0
      %p141 = por %p139, %p140
      %s142 = ssub.s32 %s33, %s45
      %p143 = scmp.eq.s32.totalorder %s142, 0
      %s145 = sadd.s32 %s144, 1
      %s146 = scalar_select %p143, %s144, %s145
      %p149 = pneg %p143
      %p150 = scmp.eq.s32.totalorder %s26, 1
      %p151 = por %p149, %p150
      %p152 = scmp.ne.s32.totalorder %s144, %s147
      %p153 = scmp.eq.s32.totalorder %s26, 0
      %p154 = por %p152, %p153
      %p155 = scmp.ne.s32.totalorder %s144, %s147
      %p156 = scmp.eq.s32.totalorder %s31, 1
      %p157 = por %p155, %p156
      %p158 = scmp.ne.s32.totalorder %s147, %s148
      %p159 = scmp.eq.s32.totalorder %s31, 0
      %p160 = por %p158, %p159
      %p161 = scmp.ne.s32.totalorder %s147, %s148
      %p162 = scmp.eq.s32.totalorder %s32, 1
      %p163 = por %p161, %p162
      %p165 = scmp.ne.s32.totalorder %s148, %s164
      %p166 = scmp.eq.s32.totalorder %s32, 0
      %p167 = por %p165, %p166
      %s169 = sadd.s32 %s168, 1
      %p172 = scmp.eq.s32.totalorder %s26, 1
      %p173 = scmp.ne.s32.totalorder %s168, %s170
      %p174 = scmp.eq.s32.totalorder %s26, 0
      %p175 = por %p173, %p174
      %p176 = scmp.ne.s32.totalorder %s168, %s170
      %p177 = scmp.eq.s32.totalorder %s31, 1
      %p178 = por %p176, %p177
      %p179 = scmp.ne.s32.totalorder %s170, %s171
      %p180 = scmp.eq.s32.totalorder %s31, 0
      %p181 = por %p179, %p180
      %p182 = scmp.ne.s32.totalorder %s170, %s171
      %p183 = scmp.eq.s32.totalorder %s32, 1
      %p184 = por %p182, %p183
      %p186 = scmp.ne.s32.totalorder %s171, %s185
      %p187 = scmp.eq.s32.totalorder %s32, 0
      %p188 = por %p186, %p187
      %s190 = sadd.s32 %s189, 1
      %p193 = scmp.eq.s32.totalorder %s26, 1
      %p194 = scmp.ne.s32.totalorder %s189, %s191
      %p195 = scmp.eq.s32.totalorder %s26, 0
      %p196 = por %p194, %p195
      %p197 = scmp.ne.s32.totalorder %s189, %s191
      %p198 = scmp.eq.s32.totalorder %s31, 1
      %p199 = por %p197, %p198
      %p200 = scmp.ne.s32.totalorder %s191, %s192
      %p201 = scmp.eq.s32.totalorder %s31, 0
      %p202 = por %p200, %p201
      %p203 = scmp.ne.s32.totalorder %s191, %s192
      %p204 = scmp.eq.s32.totalorder %s32, 1
      %p205 = por %p203, %p204
      %p207 = scmp.ne.s32.totalorder %s192, %s206
      %p208 = scmp.eq.s32.totalorder %s32, 0
      %p209 = por %p207, %p208
      %s211 = sadd.s32 %s210, 1
      %p214 = scmp.eq.s32.totalorder %s26, 1
      %p215 = scmp.ne.s32.totalorder %s210, %s212
      %p216 = scmp.eq.s32.totalorder %s26, 0
      %p217 = por %p215, %p216
      %p218 = scmp.ne.s32.totalorder %s210, %s212
      %p219 = scmp.eq.s32.totalorder %s31, 1
      %p220 = por %p218, %p219
      %p221 = scmp.ne.s32.totalorder %s212, %s213
      %p222 = scmp.eq.s32.totalorder %s31, 0
      %p223 = por %p221, %p222
      %p224 = scmp.ne.s32.totalorder %s212, %s213
      %p225 = scmp.eq.s32.totalorder %s32, 1
      %p226 = por %p224, %p225
      %p228 = scmp.ne.s32.totalorder %s213, %s227
      %p229 = scmp.eq.s32.totalorder %s32, 0
      %p230 = por %p228, %p229
      %s231 = ssub.s32 %s33, %s45
      %s232 = ssub.s32 %s34, %s41
      %s233 = sor.u32 %s231, %s232
      %p234 = scmp.eq.s32.totalorder %s233, 0
      %s236 = sadd.s32 %s235, 1
      %s237 = scalar_select %p234, %s235, %s236
      %p240 = pneg %p234
      %p241 = scmp.eq.s32.totalorder %s26, 1
      %p242 = por %p240, %p241
      %p243 = scmp.ne.s32.totalorder %s235, %s238
      %p244 = scmp.eq.s32.totalorder %s26, 0
      %p245 = por %p243, %p244
      %p246 = scmp.ne.s32.totalorder %s235, %s238
      %p247 = scmp.eq.s32.totalorder %s31, 1
      %p248 = por %p246, %p247
      %p249 = scmp.ne.s32.totalorder %s238, %s239
      %p250 = scmp.eq.s32.totalorder %s31, 0
      %p251 = por %p249, %p250
      %p252 = scmp.ne.s32.totalorder %s238, %s239
      %p253 = scmp.eq.s32.totalorder %s32, 1
      %p254 = por %p252, %p253
      %p256 = scmp.ne.s32.totalorder %s239, %s255
      %p257 = scmp.eq.s32.totalorder %s32, 0
      %p258 = por %p256, %p257
      %p259 = scmp.le.s32.totalorder 1, %s26
      %p260 = scmp.lt.s32.totalorder %s26, 3
      %p261 = pnand %p259, %p260
      %p262 = pneg %p261
      // Predicated region
      $region9: #{tpu_custom_call.1} parent=5 // pred_check
        _
      $region10: #{tpu_custom_call.1} parent=5 // pred_check_branch
        %264 = sbr.rel (%p261) target = $region12
      $region11: #{tpu_custom_call.1} parent=5 // pred_region
        %s265 = ssub.s32 %s26, 1
        // Predicated region
        $region13: #{tpu_custom_call.1} parent=11 // pred_check
          %p266 = pneg %p87
        $region14: #{tpu_custom_call.1} parent=11 // pred_check_branch
          %268 = sbr.rel (%p266) target = $region16
        $region15: #{tpu_custom_call.1} parent=11 // pred_region
          _
        $region16: #{tpu_custom_call.1} parent=11 // pred_fallthru
          _
        // Predicated region
        $region17: #{tpu_custom_call.1} parent=11 // pred_check
          %p269 = pneg %p108
        $region18: #{tpu_custom_call.1} parent=11 // pred_check_branch
          %271 = sbr.rel (%p269) target = $region20
        $region19: #{tpu_custom_call.1} parent=11 // pred_region
          %s273 = ssub.s32 16, 16
          %274 = vsyncadd [#allocation6], %s273
          %s276 = sshll.u32 [#allocation5], 4
          %s277 = int_to_ptr.vmem [resolvable:$true] %s276
          %279 = dma.hbm_to_vmem [thread:$0]  %s4, 16, %s277, [#allocation6]
        $region20: #{tpu_custom_call.1} parent=11 // pred_fallthru
          _
        // Predicated region
        $region21: #{tpu_custom_call.1} parent=11 // pred_check
          %p280 = pneg %p181
        $region22: #{tpu_custom_call.1} parent=11 // pred_check_branch
          %282 = sbr.rel (%p280) target = $region24
        $region23: #{tpu_custom_call.1} parent=11 // pred_region
          _
        $region24: #{tpu_custom_call.1} parent=11 // pred_fallthru
          _
        // Predicated region
        $region25: #{tpu_custom_call.1} parent=11 // pred_check
          %p283 = pneg %p202
        $region26: #{tpu_custom_call.1} parent=11 // pred_check_branch
          %285 = sbr.rel (%p283) target = $region28
        $region27: #{tpu_custom_call.1} parent=11 // pred_region
          _
        $region28: #{tpu_custom_call.1} parent=11 // pred_fallthru
          _
        // Predicated region
        $region29: #{tpu_custom_call.1} parent=11 // pred_check
          %p286 = pneg %p223
        $region30: #{tpu_custom_call.1} parent=11 // pred_check_branch
          %288 = sbr.rel (%p286) target = $region32
        $region31: #{tpu_custom_call.1} parent=11 // pred_region
          _
        $region32: #{tpu_custom_call.1} parent=11 // pred_fallthru
          _
      $region12: #{tpu_custom_call.1} parent=5 // pred_fallthru
        _
      %p289 = scmp.lt.s32.totalorder %s26, 2
      // Predicated region
      $region33: #{tpu_custom_call.1} parent=5 // pred_check
        %p290 = pneg %p289
      $region34: #{tpu_custom_call.1} parent=5 // pred_check_branch
        %292 = sbr.rel (%p290) target = $region36
      $region35: #{tpu_custom_call.1} parent=5 // pred_region
        // Predicated region
        $region37: #{tpu_custom_call.1} parent=35 // pred_check
          %p293 = pneg %p60
        $region38: #{tpu_custom_call.1} parent=35 // pred_check_branch
          %295 = sbr.rel (%p293) target = $region40
        $region39: #{tpu_custom_call.1} parent=35 // pred_region
          %s296 = smul.u32 8, %s34
          %p297 = scmp.lt.s32.totalorder %s33, 1
          %s298 = scalar_select %p297, %s33, 1
          %p299 = scmp.lt.s32.totalorder %s296, 7
          %s300 = scalar_select %p299, %s296, 7
          %s301 = smul.addr %s298, 8
          %s302 = sadd.s32 %s300, %s301
          %s303 = smul.addr %s302, 4
          %s304 = scalar_lea.vmem %s2, %s303
          %s305 = smul.u32 8, %s34
        $region40: #{tpu_custom_call.1} parent=35 // pred_fallthru
          _
        // Predicated region
        $region41: #{tpu_custom_call.1} parent=35 // pred_check
          %p306 = pneg %p128
        $region42: #{tpu_custom_call.1} parent=35 // pred_check_branch
          %308 = sbr.rel (%p306) target = $region44
        $region43: #{tpu_custom_call.1} parent=35 // pred_region
          %p309 = scmp.lt.s32.totalorder %s33, 1
          %s310 = scalar_select %p309, %s33, 1
          %s311 = smul.addr %s310, 16
          %s312 = smul.addr %s311, 4
          %s313 = scalar_lea.vmem %s5, %s312
        $region44: #{tpu_custom_call.1} parent=35 // pred_fallthru
          _
        // Predicated region
        $region45: #{tpu_custom_call.1} parent=35 // pred_check
          %p314 = pneg %p154
        $region46: #{tpu_custom_call.1} parent=35 // pred_check_branch
          %316 = sbr.rel (%p314) target = $region48
        $region47: #{tpu_custom_call.1} parent=35 // pred_region
          %p317 = scmp.lt.s32.totalorder %s33, 1
          %s318 = scalar_select %p317, %s33, 1
          %s319 = smul.addr %s318, 4
          %s320 = smul.addr %s319, 4
          %s321 = scalar_lea.vmem %s6, %s320
        $region48: #{tpu_custom_call.1} parent=35 // pred_fallthru
          _
      $region36: #{tpu_custom_call.1} parent=5 // pred_fallthru
        _
      %p322 = scmp.le.s32.totalorder 1, %s26
      %p323 = scmp.lt.s32.totalorder %s26, 3
      %p324 = pnand %p322, %p323
      %p325 = pneg %p324
      // Predicated region
      $region49: #{tpu_custom_call.1} parent=5 // pred_check
        _
      $region50: #{tpu_custom_call.1} parent=5 // pred_check_branch
        %327 = sbr.rel (%p324) target = $region52
      $region51: #{tpu_custom_call.1} parent=5 // pred_region
        %s328 = ssub.s32 %s26, 1
        // Predicated region
        $region53: #{tpu_custom_call.1} parent=51 // pred_check
          %p329 = pneg %p108
        $region54: #{tpu_custom_call.1} parent=51 // pred_check_branch
          %331 = sbr.rel (%p329) target = $region56
        $region55: #{tpu_custom_call.1} parent=51 // pred_region
          %332 = dma.done [#allocation6], 16
        $region56: #{tpu_custom_call.1} parent=51 // pred_fallthru
          _
        %s333 = smul.u32 8, %s36
        %p334 = scmp.lt.s32.totalorder %s35, 1
        %s335 = scalar_select %p334, %s35, 1
        %p336 = scmp.lt.s32.totalorder %s333, 7
        %s337 = scalar_select %p336, %s333, 7
        %s338 = smul.addr %s335, 8
        %s339 = sadd.s32 %s337, %s338
        %s340 = smul.addr %s339, 4
        %s341 = scalar_lea.vmem %s2, %s340
        %p342 = pneg %p66
        %p343 = pneg %p63
        %p344 = pneg %p87
        %p345 = pneg %p84
        %p346 = pneg %p108
        %p347 = pneg %p105
        %p348 = scmp.lt.s32.totalorder %s35, 1
        %s349 = scalar_select %p348, %s35, 1
        %s350 = smul.addr %s349, 16
        %s351 = smul.addr %s350, 4
        %s352 = scalar_lea.vmem %s5, %s351
        %p353 = pneg %p134
        %p354 = pneg %p131
        %p355 = scmp.lt.s32.totalorder %s35, 1
        %s356 = scalar_select %p355, %s35, 1
        %s357 = smul.addr %s356, 4
        %s358 = smul.addr %s357, 4
        %s359 = scalar_lea.vmem %s6, %s358
        %p360 = pneg %p160
        %p361 = pneg %p157
        %p362 = pneg %p181
        %p363 = pneg %p178
        %p364 = pneg %p202
        %p365 = pneg %p199
        %p366 = pneg %p223
        %p367 = pneg %p220
        %p368 = pneg %p251
        %p369 = pneg %p248
        %s370 = sand.u32 %s238, 1
        %s371 = scalar_lea.sflag [#allocation7], %s370
        %s372 = sand.u32 %s238, 1
        %s373 = smul.addr %s372, 64
        %s374 = scalar_lea.vmem [#allocation8], %s373
        %s375 = smul.u32 8, %s36
        %p376 = scmp.lt.s32.totalorder %s35, 1
        %s377 = scalar_select %p376, %s35, 1
        %p378 = scmp.lt.s32.totalorder %s375, 7
        %s379 = scalar_select %p378, %s375, 7
        %s380 = smul.addr %s377, 8
        %s381 = sadd.s32 %s379, %s380
        %s382 = smul.addr %s381, 4
        %s383 = scalar_lea.vmem %s2, %s382
        %s384 = smul.u32 8, %s36
        %p385 = scmp.lt.s32.totalorder %s35, 1
        %s386 = scalar_select %p385, %s35, 1
        %s387 = smul.addr %s386, 16
        %s388 = smul.addr %s387, 4
        %s389 = scalar_lea.vmem %s5, %s388
        %p390 = scmp.lt.s32.totalorder %s35, 1
        %s391 = scalar_select %p390, %s35, 1
        %s392 = smul.addr %s391, 4
        %s393 = smul.addr %s392, 4
        %s394 = scalar_lea.vmem %s6, %s393
        %s395 = smul.u32 8, %s36
        %s397 = sld [smem:[#allocation3 + %s35]]
        %s398 = sld [smem:[#allocation4 + %s35]]
        %v399 = vld [vmem:[%s383] sm:$0xf]
        %v400 = vld [vmem:[%s383 + $0x4] sm:$0xf]
        %v401 = vld [vmem:[%s383 + $0x8] sm:$0xf]
        %v402 = vld [vmem:[%s383 + $0xc] sm:$0xf]
        %v403 = vld [vmem:[%s383 + $0x10] sm:$0xf]
        %v404 = vld [vmem:[%s383 + $0x14] sm:$0xf]
        %v405 = vld [vmem:[%s383 + $0x18] sm:$0xf]
        %v406 = vld [vmem:[%s383 + $0x1c] sm:$0xf]
        %v407 = vunpack.c.l.bf16 %v399
        %v408 = vunpack.c.l.bf16 %v400
        %v409 = vunpack.c.l.bf16 %v401
        %v410 = vunpack.c.l.bf16 %v402
        %v411 = vunpack.c.l.bf16 %v403
        %v412 = vunpack.c.l.bf16 %v404
        %v413 = vunpack.c.l.bf16 %v405
        %v414 = vunpack.c.l.bf16 %v406
        %v415 = vstv %s397
        %v416 = vsub.f32 %v407, %v415
        %v417 = vsub.f32 %v408, %v415
        %v418 = vsub.f32 %v409, %v415
        %v419 = vsub.f32 %v410, %v415
        %v420 = vsub.f32 %v411, %v415
        %v421 = vsub.f32 %v412, %v415
        %v422 = vsub.f32 %v413, %v415
        %v423 = vsub.f32 %v414, %v415
        %v424 = vstv %s398
        %v425 = vmul.f32 %v416, %v424
        %v426 = vmul.f32 %v417, %v424
        %v427 = vmul.f32 %v418, %v424
        %v428 = vmul.f32 %v419, %v424
        %v429 = vmul.f32 %v420, %v424
        %v430 = vmul.f32 %v421, %v424
        %v431 = vmul.f32 %v422, %v424
        %v432 = vmul.f32 %v423, %v424
        %v433 = vpack.c.bf16 %v426, %v425
        %v434 = vpack.c.bf16 %v428, %v427
        %v435 = vpack.c.bf16 %v430, %v429
        %v436 = vpack.c.bf16 %v432, %v431
        %v437 = vld [vmem:[%s3] sm:$0xf]
        %v438 = vld [vmem:[%s3 + $0x4] sm:$0xf]
        %v439 = vld [vmem:[%s3 + $0x8] sm:$0xf]
        %v440 = vld [vmem:[%s3 + $0xc] sm:$0xf]
        %v441 = vld [vmem:[%s3 + $0x10] sm:$0xf]
        %v442 = vld [vmem:[%s3 + $0x14] sm:$0xf]
        %v443 = vld [vmem:[%s3 + $0x18] sm:$0xf]
        %v444 = vld [vmem:[%s3 + $0x1c] sm:$0xf]
        %v445 = vld [vmem:[%s3 + $0x20] sm:$0xf]
        %v446 = vld [vmem:[%s3 + $0x24] sm:$0xf]
        %v447 = vld [vmem:[%s3 + $0x28] sm:$0xf]
        %v448 = vld [vmem:[%s3 + $0x2c] sm:$0xf]
        %v449 = vld [vmem:[%s3 + $0x30] sm:$0xf]
        %v450 = vld [vmem:[%s3 + $0x34] sm:$0xf]
        %v451 = vld [vmem:[%s3 + $0x38] sm:$0xf]
        %v452 = vld [vmem:[%s3 + $0x3c] sm:$0xf]
        %v453 = vld [vmem:[#allocation5] sm:$0x1]
        %v455 = vlaneseq
        %v456 = vshrl.u32 %v455, 7
        %v457 = vsub.s32 0, %v456
        %v458 = vrot.slane %v453, %v457
        %v476 = vunpack.c.l.b16 %v437
        %v477 = vunpack.c.l.b16 %v438
        %v478 = vunpack.c.l.b16 %v439
        %v479 = vunpack.c.l.b16 %v440
        %v480 = vunpack.c.l.b16 %v441
        %v481 = vunpack.c.l.b16 %v442
        %v482 = vunpack.c.l.b16 %v443
        %v483 = vunpack.c.l.b16 %v444
        %v484 = vunpack.c.l.b16 %v445
        %v485 = vunpack.c.l.b16 %v446
        %v486 = vunpack.c.l.b16 %v447
        %v487 = vunpack.c.l.b16 %v448
        %v488 = vunpack.c.l.b16 %v449
        %v489 = vunpack.c.l.b16 %v450
        %v490 = vunpack.c.l.b16 %v451
        %v491 = vunpack.c.l.b16 %v452
        %v492 = vpack.c.b16 %v477, %v476
        %v493 = vpack.c.b16 %v479, %v478
        %v494 = vpack.c.b16 %v481, %v480
        %v495 = vpack.c.b16 %v483, %v482
        %v496 = vpack.c.b16 %v485, %v484
        %v497 = vpack.c.b16 %v487, %v486
        %v498 = vpack.c.b16 %v489, %v488
        %v499 = vpack.c.b16 %v491, %v490
        %508 = vmatprep.subr.bf16.mxu0 0
        %509 = vmatpush1.bf16.msra.mxu0 %v492
        %510 = vmatprep.subr.bf16.mxu0 0
        %511 = vmatpush1.bf16.msra.mxu0 %v493
        %512 = vmatprep.subr.bf16.mxu0 0
        %513 = vmatpush1.bf16.msra.mxu0 %v494
        %514 = vmatprep.subr.bf16.mxu0 0
        %515 = vmatpush1.bf16.msra.mxu0 %v495
        %516 = vmatprep.subr.bf16.mxu0 0
        %517 = vmatpush1.bf16.msra.mxu0 %v496
        %518 = vmatprep.subr.bf16.mxu0 0
        %519 = vmatpush1.bf16.msra.mxu0 %v497
        %520 = vmatprep.subr.bf16.mxu0 0
        %521 = vmatpush1.bf16.msra.mxu0 %v498
        %522 = vmatprep.subr.bf16.mxu0 0
        %523 = vmatpush1.bf16.msra.mxu0 %v499
        %524 = vmatprep.subr.bf16.mxu0 0
        %525 = vmatpush1.bf16.msra.mxu0 0
        %526 = vmatprep.subr.bf16.mxu0 0
        %527 = vmatpush1.bf16.msra.mxu0 0
        %528 = vmatprep.subr.bf16.mxu0 0
        %529 = vmatpush1.bf16.msra.mxu0 0
        %530 = vmatprep.subr.bf16.mxu0 0
        %531 = vmatpush1.bf16.msra.mxu0 0
        %532 = vmatprep.subr.bf16.mxu0 0
        %533 = vmatpush1.bf16.msra.mxu0 0
        %534 = vmatprep.subr.bf16.mxu0 0
        %535 = vmatpush1.bf16.msra.mxu0 0
        %536 = vmatprep.subr.bf16.mxu0 0
        %537 = vmatpush1.bf16.msra.mxu0 0
        %538 = vmatprep.subr.bf16.mxu0 0
        %539 = vmatpush1.bf16.msra.mxu0 0
        %540 = vmatprep.mubr.bf16.mxu0 0
        %541 = vmatmul.mubr.bf16.gmra.mrb[0].mxu0 %v433
        %v542 = vpop.f32.mrb[0].mxu0
        %v543 = vadd.f32 %v458, %v542
        %v544 = vpop.f32.mrb[0].mxu0
        %v545 = vpop.f32.mrb[0].mxu0
        %v546 = vadd.f32 %v458, %v545
        %v547 = vpop.f32.mrb[0].mxu0
        %548 = vmatprep.mubr.bf16.mxu0 0
        %549 = vmatmul.mubr.bf16.gmra.mrb[0].mxu0 %v434
        %v550 = vpop.f32.mrb[0].mxu0
        %v551 = vadd.f32 %v458, %v550
        %v552 = vpop.f32.mrb[0].mxu0
        %v553 = vpop.f32.mrb[0].mxu0
        %v554 = vadd.f32 %v458, %v553
        %v555 = vpop.f32.mrb[0].mxu0
        %556 = vmatprep.mubr.bf16.mxu0 0
        %557 = vmatmul.mubr.bf16.gmra.mrb[0].mxu0 %v435
        %v558 = vpop.f32.mrb[0].mxu0
        %v559 = vadd.f32 %v458, %v558
        %v560 = vpop.f32.mrb[0].mxu0
        %v561 = vpop.f32.mrb[0].mxu0
        %v562 = vadd.f32 %v458, %v561
        %v563 = vpop.f32.mrb[0].mxu0
        %564 = vmatprep.mubr.bf16.mxu0 0
        %565 = vmatmul.mubr.bf16.gmra.mrb[0].mxu0 %v436
        %v566 = vpop.f32.mrb[0].mxu0
        %v567 = vadd.f32 %v458, %v566
        %v568 = vpop.f32.mrb[0].mxu0
        %v569 = vpop.f32.mrb[0].mxu0
        %v570 = vadd.f32 %v458, %v569
        %v571 = vpop.f32.mrb[0].mxu0
        %572 = vdwg.mxu0
        %v573 = vpack.c.bf16 %v546, %v543
        %v574 = vpack.c.bf16 %v554, %v551
        %v575 = vpack.c.bf16 %v562, %v559
        %v576 = vpack.c.bf16 %v570, %v567
        %v577 = vld [vmem:[%s389] sm:$0xf]
        %v578 = vld [vmem:[%s389 + $0x4] sm:$0xf]
        %v579 = vld [vmem:[%s389 + $0x8] sm:$0xf]
        %v580 = vld [vmem:[%s389 + $0xc] sm:$0xf]
        %v581 = vld [vmem:[%s389 + $0x10] sm:$0xf]
        %v582 = vld [vmem:[%s389 + $0x14] sm:$0xf]
        %v583 = vld [vmem:[%s389 + $0x18] sm:$0xf]
        %v584 = vld [vmem:[%s389 + $0x1c] sm:$0xf]
        %v585 = vld [vmem:[%s389 + $0x20] sm:$0xf]
        %v586 = vld [vmem:[%s389 + $0x24] sm:$0xf]
        %v587 = vld [vmem:[%s389 + $0x28] sm:$0xf]
        %v588 = vld [vmem:[%s389 + $0x2c] sm:$0xf]
        %v589 = vld [vmem:[%s389 + $0x30] sm:$0xf]
        %v590 = vld [vmem:[%s389 + $0x34] sm:$0xf]
        %v591 = vld [vmem:[%s389 + $0x38] sm:$0xf]
        %v592 = vld [vmem:[%s389 + $0x3c] sm:$0xf]
        %v609 = vunpack.c.l.b16 %v577
        %v610 = vunpack.c.l.b16 %v578
        %v611 = vunpack.c.l.b16 %v579
        %v612 = vunpack.c.l.b16 %v580
        %v613 = vunpack.c.l.b16 %v581
        %v614 = vunpack.c.l.b16 %v582
        %v615 = vunpack.c.l.b16 %v583
        %v616 = vunpack.c.l.b16 %v584
        %v617 = vunpack.c.l.b16 %v585
        %v618 = vunpack.c.l.b16 %v586
        %v619 = vunpack.c.l.b16 %v587
        %v620 = vunpack.c.l.b16 %v588
        %v621 = vunpack.c.l.b16 %v589
        %v622 = vunpack.c.l.b16 %v590
        %v623 = vunpack.c.l.b16 %v591
        %v624 = vunpack.c.l.b16 %v592
        %v625 = vpack.c.b16 %v610, %v609
        %v626 = vpack.c.b16 %v612, %v611
        %v627 = vpack.c.b16 %v614, %v613
        %v628 = vpack.c.b16 %v616, %v615
        %v629 = vpack.c.b16 %v618, %v617
        %v630 = vpack.c.b16 %v620, %v619
        %v631 = vpack.c.b16 %v622, %v621
        %v632 = vpack.c.b16 %v624, %v623
        %641 = vmatprep.subr.bf16.mxu0 0
        %642 = vmatpush1.bf16.msra.mxu0 %v625
        %643 = vmatprep.subr.bf16.mxu0 0
        %644 = vmatpush1.bf16.msra.mxu0 %v626
        %645 = vmatprep.subr.bf16.mxu0 0
        %646 = vmatpush1.bf16.msra.mxu0 %v627
        %647 = vmatprep.subr.bf16.mxu0 0
        %648 = vmatpush1.bf16.msra.mxu0 %v628
        %649 = vmatprep.subr.bf16.mxu0 0
        %650 = vmatpush1.bf16.msra.mxu0 %v629
        %651 = vmatprep.subr.bf16.mxu0 0
        %652 = vmatpush1.bf16.msra.mxu0 %v630
        %653 = vmatprep.subr.bf16.mxu0 0
        %654 = vmatpush1.bf16.msra.mxu0 %v631
        %655 = vmatprep.subr.bf16.mxu0 0
        %656 = vmatpush1.bf16.msra.mxu0 %v632
        %657 = vmatprep.subr.bf16.mxu0 0
        %658 = vmatpush1.bf16.msra.mxu0 0
        %659 = vmatprep.subr.bf16.mxu0 0
        %660 = vmatpush1.bf16.msra.mxu0 0
        %661 = vmatprep.subr.bf16.mxu0 0
        %662 = vmatpush1.bf16.msra.mxu0 0
        %663 = vmatprep.subr.bf16.mxu0 0
        %664 = vmatpush1.bf16.msra.mxu0 0
        %665 = vmatprep.subr.bf16.mxu0 0
        %666 = vmatpush1.bf16.msra.mxu0 0
        %667 = vmatprep.subr.bf16.mxu0 0
        %668 = vmatpush1.bf16.msra.mxu0 0
        %669 = vmatprep.subr.bf16.mxu0 0
        %670 = vmatpush1.bf16.msra.mxu0 0
        %671 = vmatprep.subr.bf16.mxu0 0
        %672 = vmatpush1.bf16.msra.mxu0 0
        %673 = vmatprep.mubr.bf16.mxu0 0
        %674 = vmatmul.mubr.bf16.gmra.mrb[0].mxu0 %v573
        %v675 = vpop.f32.mrb[0].mxu0
        %v676 = vadd.f32 0.0, %v675
        %v677 = vpop.f32.mrb[0].mxu0
        %v678 = vpop.f32.mrb[0].mxu0
        %v679 = vadd.f32 0.0, %v678
        %v680 = vpop.f32.mrb[0].mxu0
        %681 = vmatprep.mubr.bf16.mxu0 0
        %682 = vmatmul.mubr.bf16.gmra.mrb[0].mxu0 %v574
        %v683 = vpop.f32.mrb[0].mxu0
        %v684 = vadd.f32 0.0, %v683
        %v685 = vpop.f32.mrb[0].mxu0
        %v686 = vpop.f32.mrb[0].mxu0
        %v687 = vadd.f32 0.0, %v686
        %v688 = vpop.f32.mrb[0].mxu0
        %689 = vmatprep.mubr.bf16.mxu0 0
        %690 = vmatmul.mubr.bf16.gmra.mrb[0].mxu0 %v575
        %v691 = vpop.f32.mrb[0].mxu0
        %v692 = vadd.f32 0.0, %v691
        %v693 = vpop.f32.mrb[0].mxu0
        %v694 = vpop.f32.mrb[0].mxu0
        %v695 = vadd.f32 0.0, %v694
        %v696 = vpop.f32.mrb[0].mxu0
        %697 = vmatprep.mubr.bf16.mxu0 0
        %698 = vmatmul.mubr.bf16.gmra.mrb[0].mxu0 %v576
        %v699 = vpop.f32.mrb[0].mxu0
        %v700 = vadd.f32 0.0, %v699
        %v701 = vpop.f32.mrb[0].mxu0
        %v702 = vpop.f32.mrb[0].mxu0
        %v703 = vadd.f32 0.0, %v702
        %v704 = vpop.f32.mrb[0].mxu0
        %705 = vdwg.mxu0
        %v706 = vld [vmem:[%s8] sm:$0x1]
        %vm707 = vcmp.gt.f32.partialorder %v706, 0.5
        %v708 = vsel %vm707, 1, 0
        %v709 = vlaneseq
        %v710 = vshrl.u32 %v709, 7
        %v711 = vsub.s32 0, %v710
        %v712 = vrot.slane %v708, %v711
        %vm713 = vcmp.eq.s32.totalorder %v712, 1
        %v714 = vsel %vm713, %v676, -1e+30
        %v715 = vsel %vm713, %v679, -1e+30
        %v716 = vsel %vm713, %v684, -1e+30
        %v717 = vsel %vm713, %v687, -1e+30
        %v718 = vsel %vm713, %v692, -1e+30
        %v719 = vsel %vm713, %v695, -1e+30
        %v720 = vsel %vm713, %v700, -1e+30
        %v721 = vsel %vm713, %v703, -1e+30
        %vm722 = vcmask 261120
        %v723 = vsel %vm722, %v714, -inf
        %724 = vmax.xlane.f32.xlu0 %v723
        %v725 = vpop.xlane.xlu0 %724
        %v726 = vsel %vm722, %v715, -inf
        %727 = vmax.xlane.f32.xlu0 %v726
        %v728 = vpop.xlane.xlu0 %727
        %v729 = vsel %vm722, %v716, -inf
        %730 = vmax.xlane.f32.xlu0 %v729
        %v731 = vpop.xlane.xlu0 %730
        %v732 = vsel %vm722, %v717, -inf
        %733 = vmax.xlane.f32.xlu0 %v732
        %v734 = vpop.xlane.xlu0 %733
        %v735 = vsel %vm722, %v718, -inf
        %736 = vmax.xlane.f32.xlu0 %v735
        %v737 = vpop.xlane.xlu0 %736
        %v738 = vsel %vm722, %v719, -inf
        %739 = vmax.xlane.f32.xlu0 %v738
        %v740 = vpop.xlane.xlu0 %739
        %v741 = vsel %vm722, %v720, -inf
        %742 = vmax.xlane.f32.xlu0 %v741
        %v743 = vpop.xlane.xlu0 %742
        %v744 = vsel %vm722, %v721, -inf
        %745 = vmax.xlane.f32.xlu0 %v744
        %v746 = vpop.xlane.xlu0 %745
        %v747 = vsel %vm713, %v725, 0.0
        %v748 = vsel %vm713, %v728, 0.0
        %v749 = vsel %vm713, %v731, 0.0
        %v750 = vsel %vm713, %v734, 0.0
        %v751 = vsel %vm713, %v737, 0.0
        %v752 = vsel %vm713, %v740, 0.0
        %v753 = vsel %vm713, %v743, 0.0
        %v754 = vsel %vm713, %v746, 0.0
        %v755 = vld [vmem:[%s8 + $0x1] sm:$0x1]
        %vm756 = vcmp.gt.f32.partialorder %v755, 0.5
        %v757 = vsel %vm756, 1, 0
        %v758 = vlaneseq
        %v759 = vshrl.u32 %v758, 7
        %v760 = vsub.s32 0, %v759
        %v761 = vrot.slane %v757, %v760
        %vm762 = vcmp.eq.s32.totalorder %v761, 1
        %v763 = vsel %vm762, %v676, -1e+30
        %v764 = vsel %vm762, %v679, -1e+30
        %v765 = vsel %vm762, %v684, -1e+30
        %v766 = vsel %vm762, %v687, -1e+30
        %v767 = vsel %vm762, %v692, -1e+30
        %v768 = vsel %vm762, %v695, -1e+30
        %v769 = vsel %vm762, %v700, -1e+30
        %v770 = vsel %vm762, %v703, -1e+30
        %v771 = vsel %vm722, %v763, -inf
        %772 = vmax.xlane.f32.xlu0 %v771
        %v773 = vpop.xlane.xlu0 %772
        %v774 = vsel %vm722, %v764, -inf
        %775 = vmax.xlane.f32.xlu0 %v774
        %v776 = vpop.xlane.xlu0 %775
        %v777 = vsel %vm722, %v765, -inf
        %778 = vmax.xlane.f32.xlu0 %v777
        %v779 = vpop.xlane.xlu0 %778
        %v780 = vsel %vm722, %v766, -inf
        %781 = vmax.xlane.f32.xlu0 %v780
        %v782 = vpop.xlane.xlu0 %781
        %v783 = vsel %vm722, %v767, -inf
        %784 = vmax.xlane.f32.xlu0 %v783
        %v785 = vpop.xlane.xlu0 %784
        %v786 = vsel %vm722, %v768, -inf
        %787 = vmax.xlane.f32.xlu0 %v786
        %v788 = vpop.xlane.xlu0 %787
        %v789 = vsel %vm722, %v769, -inf
        %790 = vmax.xlane.f32.xlu0 %v789
        %v791 = vpop.xlane.xlu0 %790
        %v792 = vsel %vm722, %v770, -inf
        %793 = vmax.xlane.f32.xlu0 %v792
        %v794 = vpop.xlane.xlu0 %793
        %v795 = vsel %vm762, %v773, %v747
        %v796 = vsel %vm762, %v776, %v748
        %v797 = vsel %vm762, %v779, %v749
        %v798 = vsel %vm762, %v782, %v750
        %v799 = vsel %vm762, %v785, %v751
        %v800 = vsel %vm762, %v788, %v752
        %v801 = vsel %vm762, %v791, %v753
        %v802 = vsel %vm762, %v794, %v754
        %v803 = vld [vmem:[%s8 + $0x2] sm:$0x1]
        %vm804 = vcmp.gt.f32.partialorder %v803, 0.5
        %v805 = vsel %vm804, 1, 0
        %v806 = vlaneseq
        %v807 = vshrl.u32 %v806, 7
        %v808 = vsub.s32 0, %v807
        %v809 = vrot.slane %v805, %v808
        %vm810 = vcmp.eq.s32.totalorder %v809, 1
        %v811 = vsel %vm810, %v676, -1e+30
        %v812 = vsel %vm810, %v679, -1e+30
        %v813 = vsel %vm810, %v684, -1e+30
        %v814 = vsel %vm810, %v687, -1e+30
        %v815 = vsel %vm810, %v692, -1e+30
        %v816 = vsel %vm810, %v695, -1e+30
        %v817 = vsel %vm810, %v700, -1e+30
        %v818 = vsel %vm810, %v703, -1e+30
        %v819 = vsel %vm722, %v811, -inf
        %820 = vmax.xlane.f32.xlu0 %v819
        %v821 = vpop.xlane.xlu0 %820
        %v822 = vsel %vm722, %v812, -inf
        %823 = vmax.xlane.f32.xlu0 %v822
        %v824 = vpop.xlane.xlu0 %823
        %v825 = vsel %vm722, %v813, -inf
        %826 = vmax.xlane.f32.xlu0 %v825
        %v827 = vpop.xlane.xlu0 %826
        %v828 = vsel %vm722, %v814, -inf
        %829 = vmax.xlane.f32.xlu0 %v828
        %v830 = vpop.xlane.xlu0 %829
        %v831 = vsel %vm722, %v815, -inf
        %832 = vmax.xlane.f32.xlu0 %v831
        %v833 = vpop.xlane.xlu0 %832
        %v834 = vsel %vm722, %v816, -inf
        %835 = vmax.xlane.f32.xlu0 %v834
        %v836 = vpop.xlane.xlu0 %835
        %v837 = vsel %vm722, %v817, -inf
        %838 = vmax.xlane.f32.xlu0 %v837
        %v839 = vpop.xlane.xlu0 %838
        %v840 = vsel %vm722, %v818, -inf
        %841 = vmax.xlane.f32.xlu0 %v840
        %v842 = vpop.xlane.xlu0 %841
        %v843 = vsel %vm810, %v821, %v795
        %v844 = vsel %vm810, %v824, %v796
        %v845 = vsel %vm810, %v827, %v797
        %v846 = vsel %vm810, %v830, %v798
        %v847 = vsel %vm810, %v833, %v799
        %v848 = vsel %vm810, %v836, %v800
        %v849 = vsel %vm810, %v839, %v801
        %v850 = vsel %vm810, %v842, %v802
        %v851 = vld [vmem:[%s8 + $0x3] sm:$0x1]
        %vm852 = vcmp.gt.f32.partialorder %v851, 0.5
        %v853 = vsel %vm852, 1, 0
        %v854 = vlaneseq
        %v855 = vshrl.u32 %v854, 7
        %v856 = vsub.s32 0, %v855
        %v857 = vrot.slane %v853, %v856
        %vm858 = vcmp.eq.s32.totalorder %v857, 1
        %v859 = vsel %vm858, %v676, -1e+30
        %v860 = vsel %vm858, %v679, -1e+30
        %v861 = vsel %vm858, %v684, -1e+30
        %v862 = vsel %vm858, %v687, -1e+30
        %v863 = vsel %vm858, %v692, -1e+30
        %v864 = vsel %vm858, %v695, -1e+30
        %v865 = vsel %vm858, %v700, -1e+30
        %v866 = vsel %vm858, %v703, -1e+30
        %v867 = vsel %vm722, %v859, -inf
        %868 = vmax.xlane.f32.xlu0 %v867
        %v869 = vpop.xlane.xlu0 %868
        %v870 = vsel %vm722, %v860, -inf
        %871 = vmax.xlane.f32.xlu0 %v870
        %v872 = vpop.xlane.xlu0 %871
        %v873 = vsel %vm722, %v861, -inf
        %874 = vmax.xlane.f32.xlu0 %v873
        %v875 = vpop.xlane.xlu0 %874
        %v876 = vsel %vm722, %v862, -inf
        %877 = vmax.xlane.f32.xlu0 %v876
        %v878 = vpop.xlane.xlu0 %877
        %v879 = vsel %vm722, %v863, -inf
        %880 = vmax.xlane.f32.xlu0 %v879
        %v881 = vpop.xlane.xlu0 %880
        %v882 = vsel %vm722, %v864, -inf
        %883 = vmax.xlane.f32.xlu0 %v882
        %v884 = vpop.xlane.xlu0 %883
        %v885 = vsel %vm722, %v865, -inf
        %886 = vmax.xlane.f32.xlu0 %v885
        %v887 = vpop.xlane.xlu0 %886
        %v888 = vsel %vm722, %v866, -inf
        %889 = vmax.xlane.f32.xlu0 %v888
        %v890 = vpop.xlane.xlu0 %889
        %v891 = vsel %vm858, %v869, %v843
        %v892 = vsel %vm858, %v872, %v844
        %v893 = vsel %vm858, %v875, %v845
        %v894 = vsel %vm858, %v878, %v846
        %v895 = vsel %vm858, %v881, %v847
        %v896 = vsel %vm858, %v884, %v848
        %v897 = vsel %vm858, %v887, %v849
        %v898 = vsel %vm858, %v890, %v850
        %v899 = vsub.f32 %v676, %v891
        %v900 = vsub.f32 %v679, %v892
        %v901 = vsub.f32 %v684, %v893
        %v902 = vsub.f32 %v687, %v894
        %v903 = vsub.f32 %v692, %v895
        %v904 = vsub.f32 %v695, %v896
        %v905 = vsub.f32 %v700, %v897
        %v906 = vsub.f32 %v703, %v898
        %v907 = vmul.f32 %v899, 1.442695
        %v908 = vpow.pop %v907
        %v909 = vmul.f32 %v900, 1.442695
        %v910 = vpow.pop %v909
        %v911 = vmul.f32 %v901, 1.442695
        %v912 = vpow.pop %v911
        %v913 = vmul.f32 %v902, 1.442695
        %v914 = vpow.pop %v913
        %v915 = vmul.f32 %v903, 1.442695
        %v916 = vpow.pop %v915
        %v917 = vmul.f32 %v904, 1.442695
        %v918 = vpow.pop %v917
        %v919 = vmul.f32 %v905, 1.442695
        %v920 = vpow.pop %v919
        %v921 = vmul.f32 %v906, 1.442695
        %v922 = vpow.pop %v921
        %v923 = vpack.c.bf16 %v910, %v908
        %v924 = vpack.c.bf16 %v914, %v912
        %v925 = vpack.c.bf16 %v918, %v916
        %v926 = vpack.c.bf16 %v922, %v920
        %v927 = vld [vmem:[%s9] sm:$0xf]
        %v928 = vld [vmem:[%s9 + $0x4] sm:$0xf]
        %v929 = vld [vmem:[%s9 + $0x8] sm:$0xf]
        %v930 = vld [vmem:[%s9 + $0xc] sm:$0xf]
        %v935 = vunpack.c.l.b16 %v927
        %v936 = vunpack.c.l.b16 %v928
        %v937 = vunpack.c.l.b16 %v929
        %v938 = vunpack.c.l.b16 %v930
        %v939 = vpack.c.b16 %v936, %v935
        %v940 = vpack.c.b16 %v938, %v937
        %v944 = vsel %vm722, %v923, 0
        %v947 = vsel %vm722, %v924, 0
        %v950 = vsel %vm722, %v925, 0
        %v953 = vsel %vm722, %v926, 0
        %955 = vmatprep.subr.bf16.mxu0 0
        %956 = vmatpush1.bf16.msra.mxu0 %v939
        %957 = vmatprep.subr.bf16.mxu0 0
        %958 = vmatpush1.bf16.msra.mxu0 %v940
        %959 = vmatprep.subr.bf16.mxu0 0
        %960 = vmatpush1.bf16.msra.mxu0 0
        %961 = vmatprep.subr.bf16.mxu0 0
        %962 = vmatpush1.bf16.msra.mxu0 0
        %963 = vmatprep.subr.bf16.mxu0 0
        %964 = vmatpush1.bf16.msra.mxu0 0
        %965 = vmatprep.subr.bf16.mxu0 0
        %966 = vmatpush1.bf16.msra.mxu0 0
        %967 = vmatprep.subr.bf16.mxu0 0
        %968 = vmatpush1.bf16.msra.mxu0 0
        %969 = vmatprep.subr.bf16.mxu0 0
        %970 = vmatpush1.bf16.msra.mxu0 0
        %971 = vmatprep.subr.bf16.mxu0 0
        %972 = vmatpush1.bf16.msra.mxu0 0
        %973 = vmatprep.subr.bf16.mxu0 0
        %974 = vmatpush1.bf16.msra.mxu0 0
        %975 = vmatprep.subr.bf16.mxu0 0
        %976 = vmatpush1.bf16.msra.mxu0 0
        %977 = vmatprep.subr.bf16.mxu0 0
        %978 = vmatpush1.bf16.msra.mxu0 0
        %979 = vmatprep.subr.bf16.mxu0 0
        %980 = vmatpush1.bf16.msra.mxu0 0
        %981 = vmatprep.subr.bf16.mxu0 0
        %982 = vmatpush1.bf16.msra.mxu0 0
        %983 = vmatprep.subr.bf16.mxu0 0
        %984 = vmatpush1.bf16.msra.mxu0 0
        %985 = vmatprep.subr.bf16.mxu0 0
        %986 = vmatpush1.bf16.msra.mxu0 0
        %987 = vmatprep.mubr.bf16.mxu0 0
        %988 = vmatmul.mubr.bf16.gmra.mrb[0].mxu0 %v944
        %v989 = vpop.f32.mrb[0].mxu0
        %v990 = vadd.f32 0.0, %v989
        %v991 = vpop.f32.mrb[0].mxu0
        %v992 = vpop.f32.mrb[0].mxu0
        %v993 = vadd.f32 0.0, %v992
        %v994 = vpop.f32.mrb[0].mxu0
        %995 = vmatprep.mubr.bf16.mxu0 0
        %996 = vmatmul.mubr.bf16.gmra.mrb[0].mxu0 %v947
        %v997 = vpop.f32.mrb[0].mxu0
        %v998 = vadd.f32 0.0, %v997
        %v999 = vpop.f32.mrb[0].mxu0
        %v1000 = vpop.f32.mrb[0].mxu0
        %v1001 = vadd.f32 0.0, %v1000
        %v1002 = vpop.f32.mrb[0].mxu0
        %1003 = vmatprep.mubr.bf16.mxu0 0
        %1004 = vmatmul.mubr.bf16.gmra.mrb[0].mxu0 %v950
        %v1005 = vpop.f32.mrb[0].mxu0
        %v1006 = vadd.f32 0.0, %v1005
        %v1007 = vpop.f32.mrb[0].mxu0
        %v1008 = vpop.f32.mrb[0].mxu0
        %v1009 = vadd.f32 0.0, %v1008
        %v1010 = vpop.f32.mrb[0].mxu0
        %1011 = vmatprep.mubr.bf16.mxu0 0
        %1012 = vmatmul.mubr.bf16.gmra.mrb[0].mxu0 %v953
        %v1013 = vpop.f32.mrb[0].mxu0
        %v1014 = vadd.f32 0.0, %v1013
        %v1015 = vpop.f32.mrb[0].mxu0
        %v1016 = vpop.f32.mrb[0].mxu0
        %v1017 = vadd.f32 0.0, %v1016
        %v1018 = vpop.f32.mrb[0].mxu0
        %1019 = vdwg.mxu0
        %v1020 = vpack.c.bf16 %v993, %v990
        %v1021 = vpack.c.bf16 %v1001, %v998
        %v1022 = vpack.c.bf16 %v1009, %v1006
        %v1023 = vpack.c.bf16 %v1017, %v1014
        %v1024 = vld [vmem:[%s8] sm:$0xf]
        %v1025 = vpack.c.bf16 %v1024, %v1024
        %vm1026 = vcmask 31744
        %v1028 = vsel %vm1026, %v1020, 0
        %v1031 = vsel %vm1026, %v1021, 0
        %v1034 = vsel %vm1026, %v1022, 0
        %v1037 = vsel %vm1026, %v1023, 0
        %vm1039 = vcmask 1041408
        %v1041 = vsel %vm1039, %v1025, 0
        %1043 = vmatprep.subr.bf16.mxu0 0
        %1044 = vmatpush1.bf16.msra.mxu0 %v1041
        %1045 = vmatprep.subr.bf16.mxu0 0
        %1046 = vmatpush1.bf16.msra.mxu0 0
        %1047 = vmatprep.subr.bf16.mxu0 0
        %1048 = vmatpush1.bf16.msra.mxu0 0
        %1049 = vmatprep.subr.bf16.mxu0 0
        %1050 = vmatpush1.bf16.msra.mxu0 0
        %1051 = vmatprep.subr.bf16.mxu0 0
        %1052 = vmatpush1.bf16.msra.mxu0 0
        %1053 = vmatprep.subr.bf16.mxu0 0
        %1054 = vmatpush1.bf16.msra.mxu0 0
        %1055 = vmatprep.subr.bf16.mxu0 0
        %1056 = vmatpush1.bf16.msra.mxu0 0
        %1057 = vmatprep.subr.bf16.mxu0 0
        %1058 = vmatpush1.bf16.msra.mxu0 0
        %1059 = vmatprep.subr.bf16.mxu0 0
        %1060 = vmatpush1.bf16.msra.mxu0 0
        %1061 = vmatprep.subr.bf16.mxu0 0
        %1062 = vmatpush1.bf16.msra.mxu0 0
        %1063 = vmatprep.subr.bf16.mxu0 0
        %1064 = vmatpush1.bf16.msra.mxu0 0
        %1065 = vmatprep.subr.bf16.mxu0 0
        %1066 = vmatpush1.bf16.msra.mxu0 0
        %1067 = vmatprep.subr.bf16.mxu0 0
        %1068 = vmatpush1.bf16.msra.mxu0 0
        %1069 = vmatprep.subr.bf16.mxu0 0
        %1070 = vmatpush1.bf16.msra.mxu0 0
        %1071 = vmatprep.subr.bf16.mxu0 0
        %1072 = vmatpush1.bf16.msra.mxu0 0
        %1073 = vmatprep.subr.bf16.mxu0 0
        %1074 = vmatpush1.bf16.msra.mxu0 0
        %1075 = vmatprep.mubr.bf16.mxu0 0
        %1076 = vmatmul.mubr.bf16.gmra.mrb[0].mxu0 %v1028
        %v1077 = vpop.f32.mrb[0].mxu0
        %v1078 = vadd.f32 0.0, %v1077
        %v1079 = vpop.f32.mrb[0].mxu0
        %v1080 = vpop.f32.mrb[0].mxu0
        %v1081 = vadd.f32 0.0, %v1080
        %v1082 = vpop.f32.mrb[0].mxu0
        %1083 = vmatprep.mubr.bf16.mxu0 0
        %1084 = vmatmul.mubr.bf16.gmra.mrb[0].mxu0 %v1031
        %v1085 = vpop.f32.mrb[0].mxu0
        %v1086 = vadd.f32 0.0, %v1085
        %v1087 = vpop.f32.mrb[0].mxu0
        %v1088 = vpop.f32.mrb[0].mxu0
        %v1089 = vadd.f32 0.0, %v1088
        %v1090 = vpop.f32.mrb[0].mxu0
        %1091 = vmatprep.mubr.bf16.mxu0 0
        %1092 = vmatmul.mubr.bf16.gmra.mrb[0].mxu0 %v1034
        %v1093 = vpop.f32.mrb[0].mxu0
        %v1094 = vadd.f32 0.0, %v1093
        %v1095 = vpop.f32.mrb[0].mxu0
        %v1096 = vpop.f32.mrb[0].mxu0
        %v1097 = vadd.f32 0.0, %v1096
        %v1098 = vpop.f32.mrb[0].mxu0
        %1099 = vmatprep.mubr.bf16.mxu0 0
        %1100 = vmatmul.mubr.bf16.gmra.mrb[0].mxu0 %v1037
        %v1101 = vpop.f32.mrb[0].mxu0
        %v1102 = vadd.f32 0.0, %v1101
        %v1103 = vpop.f32.mrb[0].mxu0
        %v1104 = vpop.f32.mrb[0].mxu0
        %v1105 = vadd.f32 0.0, %v1104
        %v1106 = vpop.f32.mrb[0].mxu0
        %1107 = vdwg.mxu0
        %v1108 = vrcp.pop %v1078
        %v1109 = vrcp.pop %v1081
        %v1110 = vrcp.pop %v1086
        %v1111 = vrcp.pop %v1089
        %v1112 = vrcp.pop %v1094
        %v1113 = vrcp.pop %v1097
        %v1114 = vrcp.pop %v1102
        %v1115 = vrcp.pop %v1105
        %v1116 = vmul.f32 %v908, %v1108
        %v1117 = vmul.f32 %v910, %v1109
        %v1118 = vmul.f32 %v912, %v1110
        %v1119 = vmul.f32 %v914, %v1111
        %v1120 = vmul.f32 %v916, %v1112
        %v1121 = vmul.f32 %v918, %v1113
        %v1122 = vmul.f32 %v920, %v1114
        %v1123 = vmul.f32 %v922, %v1115
        %v1124 = vpack.c.bf16 %v1117, %v1116
        %v1125 = vpack.c.bf16 %v1119, %v1118
        %v1126 = vpack.c.bf16 %v1121, %v1120
        %v1127 = vpack.c.bf16 %v1123, %v1122
        %v1128 = vld [vmem:[%s394] sm:$0xf]
        %v1129 = vld [vmem:[%s394 + $0x4] sm:$0xf]
        %v1130 = vld [vmem:[%s394 + $0x8] sm:$0xf]
        %v1131 = vld [vmem:[%s394 + $0xc] sm:$0xf]
        %v1136 = vunpack.c.l.b16 %v1128
        %v1137 = vunpack.c.l.b16 %v1129
        %v1138 = vunpack.c.l.b16 %v1130
        %v1139 = vunpack.c.l.b16 %v1131
        %v1140 = vpack.c.b16 %v1137, %v1136
        %v1141 = vpack.c.b16 %v1139, %v1138
        %v1145 = vsel %vm722, %v1124, 0
        %v1148 = vsel %vm722, %v1125, 0
        %v1151 = vsel %vm722, %v1126, 0
        %v1154 = vsel %vm722, %v1127, 0
        %1156 = vmatprep.subr.bf16.mxu0 0
        %1157 = vmatpush1.bf16.msra.mxu0 %v1140
        %1158 = vmatprep.subr.bf16.mxu0 0
        %1159 = vmatpush1.bf16.msra.mxu0 %v1141
        %1160 = vmatprep.subr.bf16.mxu0 0
        %1161 = vmatpush1.bf16.msra.mxu0 0
        %1162 = vmatprep.subr.bf16.mxu0 0
        %1163 = vmatpush1.bf16.msra.mxu0 0
        %1164 = vmatprep.subr.bf16.mxu0 0
        %1165 = vmatpush1.bf16.msra.mxu0 0
        %1166 = vmatprep.subr.bf16.mxu0 0
        %1167 = vmatpush1.bf16.msra.mxu0 0
        %1168 = vmatprep.subr.bf16.mxu0 0
        %1169 = vmatpush1.bf16.msra.mxu0 0
        %1170 = vmatprep.subr.bf16.mxu0 0
        %1171 = vmatpush1.bf16.msra.mxu0 0
        %1172 = vmatprep.subr.bf16.mxu0 0
        %1173 = vmatpush1.bf16.msra.mxu0 0
        %1174 = vmatprep.subr.bf16.mxu0 0
        %1175 = vmatpush1.bf16.msra.mxu0 0
        %1176 = vmatprep.subr.bf16.mxu0 0
        %1177 = vmatpush1.bf16.msra.mxu0 0
        %1178 = vmatprep.subr.bf16.mxu0 0
        %1179 = vmatpush1.bf16.msra.mxu0 0
        %1180 = vmatprep.subr.bf16.mxu0 0
        %1181 = vmatpush1.bf16.msra.mxu0 0
        %1182 = vmatprep.subr.bf16.mxu0 0
        %1183 = vmatpush1.bf16.msra.mxu0 0
        %1184 = vmatprep.subr.bf16.mxu0 0
        %1185 = vmatpush1.bf16.msra.mxu0 0
        %1186 = vmatprep.subr.bf16.mxu0 0
        %1187 = vmatpush1.bf16.msra.mxu0 0
        %1188 = vmatprep.mubr.bf16.mxu0 0
        %1189 = vmatmul.mubr.bf16.gmra.mrb[0].mxu0 %v1145
        %v1190 = vpop.f32.mrb[0].mxu0
        %v1191 = vadd.f32 0.0, %v1190
        %v1192 = vpop.f32.mrb[0].mxu0
        %v1193 = vpop.f32.mrb[0].mxu0
        %v1194 = vadd.f32 0.0, %v1193
        %v1195 = vpop.f32.mrb[0].mxu0
        %1196 = vmatprep.mubr.bf16.mxu0 0
        %1197 = vmatmul.mubr.bf16.gmra.mrb[0].mxu0 %v1148
        %v1198 = vpop.f32.mrb[0].mxu0
        %v1199 = vadd.f32 0.0, %v1198
        %v1200 = vpop.f32.mrb[0].mxu0
        %v1201 = vpop.f32.mrb[0].mxu0
        %v1202 = vadd.f32 0.0, %v1201
        %v1203 = vpop.f32.mrb[0].mxu0
        %1204 = vmatprep.mubr.bf16.mxu0 0
        %1205 = vmatmul.mubr.bf16.gmra.mrb[0].mxu0 %v1151
        %v1206 = vpop.f32.mrb[0].mxu0
        %v1207 = vadd.f32 0.0, %v1206
        %v1208 = vpop.f32.mrb[0].mxu0
        %v1209 = vpop.f32.mrb[0].mxu0
        %v1210 = vadd.f32 0.0, %v1209
        %v1211 = vpop.f32.mrb[0].mxu0
        %1212 = vmatprep.mubr.bf16.mxu0 0
        %1213 = vmatmul.mubr.bf16.gmra.mrb[0].mxu0 %v1154
        %v1214 = vpop.f32.mrb[0].mxu0
        %v1215 = vadd.f32 0.0, %v1214
        %v1216 = vpop.f32.mrb[0].mxu0
        %v1217 = vpop.f32.mrb[0].mxu0
        %v1218 = vadd.f32 0.0, %v1217
        %v1219 = vpop.f32.mrb[0].mxu0
        %1220 = vdwg.mxu0
        %v1221 = vadd.f32 %v407, %v1191
        %v1222 = vadd.f32 %v408, %v1194
        %v1223 = vadd.f32 %v409, %v1199
        %v1224 = vadd.f32 %v410, %v1202
        %v1225 = vadd.f32 %v411, %v1207
        %v1226 = vadd.f32 %v412, %v1210
        %v1227 = vadd.f32 %v413, %v1215
        %v1228 = vadd.f32 %v414, %v1218
        %v1229 = vld [vmem:[%s7] sm:$0x1]
        %v1231 = vlaneseq
        %v1232 = vshrl.u32 %v1231, 7
        %v1233 = vsub.s32 0, %v1232
        %v1234 = vrot.slane %v1229, %v1233
        %v1236 = vadd.f32 %v1221, %v1234
        %v1237 = vadd.f32 %v1222, %v1234
        %v1238 = vadd.f32 %v1223, %v1234
        %v1239 = vadd.f32 %v1224, %v1234
        %v1240 = vadd.f32 %v1225, %v1234
        %v1241 = vadd.f32 %v1226, %v1234
        %v1242 = vadd.f32 %v1227, %v1234
        %v1243 = vadd.f32 %v1228, %v1234
        %1244 = vst [vmem:[%s374] sm:$0xff] %v1236
        %1245 = vst [vmem:[%s374 + $0x8] sm:$0xff] %v1237
        %1246 = vst [vmem:[%s374 + $0x10] sm:$0xff] %v1238
        %1247 = vst [vmem:[%s374 + $0x18] sm:$0xff] %v1239
        %1248 = vst [vmem:[%s374 + $0x20] sm:$0xff] %v1240
        %1249 = vst [vmem:[%s374 + $0x28] sm:$0xff] %v1241
        %1250 = vst [vmem:[%s374 + $0x30] sm:$0xff] %v1242
        %1251 = vst [vmem:[%s374 + $0x38] sm:$0xff] %v1243
        %s1252 = sand.u32 %s238, 1
        %s1253 = scalar_lea.sflag [#allocation7], %s1252
        %s1254 = sand.u32 %s238, 1
        %s1255 = smul.addr %s1254, 64
        %s1256 = scalar_lea.vmem [#allocation8], %s1255
        // Predicated region
        $region57: #{tpu_custom_call.1} parent=51 // pred_check
          %p1257 = pneg %p248
        $region58: #{tpu_custom_call.1} parent=51 // pred_check_branch
          %1259 = sbr.rel (%p1257) target = $region60
        $region59: #{tpu_custom_call.1} parent=51 // pred_region
          %s1260 = smul.u32 8, %s36
          %s1262 = ssub.s32 1024, 1024
          %1263 = vsyncadd %s1253, %s1262
          %s1264 = smul.addr %s35, 8
          %s1265 = sadd.s32 %s1260, %s1264
          %s1266 = smul.addr %s1265, 128
          %s1267 = scalar_lea.hbm %s10, %s1266
          %s1268 = sshll.u32 %s1256, 4
          %s1269 = int_to_ptr.vmem [resolvable:$true] %s1268
          %1274 = dma.vmem_to_hbm [thread:$0]  %s1269, 1024, %s1267, %s1253, 128, 128, 8
        $region60: #{tpu_custom_call.1} parent=51 // pred_fallthru
          _
      $region52: #{tpu_custom_call.1} parent=5 // pred_fallthru
        _
      %p1275 = scmp.le.s32.totalorder 2, %s26
      // Predicated region
      $region61: #{tpu_custom_call.1} parent=5 // pred_check
        %p1276 = pneg %p1275
      $region62: #{tpu_custom_call.1} parent=5 // pred_check_branch
        %1278 = sbr.rel (%p1276) target = $region64
      $region63: #{tpu_custom_call.1} parent=5 // pred_region
        %s1279 = ssub.s32 %s26, 2
        // Predicated region
        $region65: #{tpu_custom_call.1} parent=63 // pred_check
          %p1280 = pneg %p254
        $region66: #{tpu_custom_call.1} parent=63 // pred_check_branch
          %1282 = sbr.rel (%p1280) target = $region68
        $region67: #{tpu_custom_call.1} parent=63 // pred_region
          %s1283 = sand.u32 %s239, 1
          %s1284 = scalar_lea.sflag [#allocation7], %s1283
          %s1285 = sand.u32 %s239, 1
          %s1286 = smul.addr %s1285, 64
          %s1287 = scalar_lea.vmem [#allocation8], %s1286
          %1288 = dma.done %s1284, 1024
        $region68: #{tpu_custom_call.1} parent=63 // pred_fallthru
          _
      $region64: #{tpu_custom_call.1} parent=5 // pred_fallthru
        _
    $region6: #{tpu_custom_call.1} parent=1 // loop_footer
      %s30 = sadd.s32 1, %s26
    $region7: #{tpu_custom_call.1} parent=1 // loop_footer_branch
      %25 = sbr.rel target = $region3
    $region8: #{tpu_custom_call.1} parent=1 // loop_exit
      _
    %1289 = vsyncpa [#allocation6], 1
    %s1290 = scalar_lea.sflag [#allocation6], 1
    %1291 = vsyncpa %s1290, 1
    %1292 = vsyncpa [#allocation7], 1
    %s1293 = scalar_lea.sflag [#allocation7], 1
    %1294 = vsyncpa %s1293, 1

</llo_original>
